<compile_context>
chip_gen: v7x
topology: tpu7x:2x2x1
jax: 0.10.0
libtpu: 0.0.40
codegen_flags: <defaults>
</compile_context>

<pallas_src>
import functools

import jax
import jax.numpy as jnp
from jax import lax
from jax.experimental import pallas as pl
from jax.experimental.pallas import tpu as pltpu


def attn_kernel(x_q_ref, x_kv_ref, wq_ref, wk_ref, wv_ref, wo_ref, bo_ref,
                o_ref, q_scr, m_scr, l_scr, acc_scr, k_cache, v_cache, *,
                heads, dim_head, scale, residual, out_scale, cache_kv):
    """Grid = (batch, q_tiles, kv_tiles). kv_tiles is the innermost reduction
    ('arbitrary') axis; per-head online-softmax state lives in VMEM scratch.
    If cache_kv: projected K/V for the whole sequence are computed once per
    batch (during qi == 0) and reused for every later q tile."""
    qi = pl.program_id(1)
    ki = pl.program_id(2)
    last_k = pl.num_programs(2) - 1
    dh = dim_head

    @pl.when(ki == 0)
    def _init():
        # Q projection for this q-tile (all heads fused, lane-dense N=inner),
        # scale folded in here so the score matmul needs no extra VPU multiply.
        xq = x_q_ref[0]                                           # (Tq, D) bf16
        q = jnp.dot(xq, wq_ref[...], preferred_element_type=jnp.float32)
        q_scr[...] = (q * scale).astype(q_scr.dtype)              # (Tq, inner) bf16
        m_scr[...] = jnp.full_like(m_scr, -jnp.inf)
        l_scr[...] = jnp.zeros_like(l_scr)
        acc_scr[...] = jnp.zeros_like(acc_scr)

    # K/V projections for this kv-tile (all heads fused). With caching they
    # are only computed during the first q-tile sweep and stored per kv slot;
    # without caching there is a single slot that is recomputed every step.
    slot = ki if cache_kv else 0

    def _project_kv():
        xkv = x_kv_ref[0]                                         # (Tk, D) bf16
        k = jnp.dot(xkv, wk_ref[...], preferred_element_type=jnp.float32)
        v = jnp.dot(xkv, wv_ref[...], preferred_element_type=jnp.float32)
        k_cache[slot] = k.astype(k_cache.dtype)
        v_cache[slot] = v.astype(v_cache.dtype)

    if cache_kv:
        @pl.when(qi == 0)
        def _fill():
            _project_kv()
    else:
        _project_kv()

    k = k_cache[slot]                                             # (Tk, inner) bf16
    v = v_cache[slot]                                             # (Tk, inner) bf16
    q_all = q_scr[...]                                            # (Tq, inner) bf16

    # Per-head online softmax. `heads` is a compile-time constant -> the loop
    # unrolls and all lane slices are static.
    for h in range(heads):
        sl = slice(h * dh, (h + 1) * dh)
        # q_h (Tq, dh) · k_h (Tk, dh) contracted on the last dim -> (Tq, Tk);
        # no explicit transpose of k.
        s = lax.dot_general(q_all[:, sl], k[:, sl],
                            (((1,), (1,)), ((), ())),
                            preferred_element_type=jnp.float32)
        m_prev = m_scr[:, h:h + 1]                                # (Tq, 1) f32
        m_new = jnp.maximum(m_prev, jnp.max(s, axis=-1, keepdims=True))
        alpha = jnp.exp(m_prev - m_new)                           # f32 stats (v5e-safe)
        p = jnp.exp(s - m_new)                                    # (Tq, Tk) f32
        l_scr[:, h:h + 1] = alpha * l_scr[:, h:h + 1] + jnp.sum(
            p, axis=-1, keepdims=True)
        acc_scr[:, sl] = alpha * acc_scr[:, sl] + jnp.dot(
            p.astype(jnp.bfloat16), v[:, sl],
            preferred_element_type=jnp.float32)
        m_scr[:, h:h + 1] = m_new

    @pl.when(ki == last_k)
    def _finalize():
        # Deferred softmax normalization: one approximate reciprocal (EUP),
        # applied to the (Tq, inner) accumulator instead of the score tile.
        inv_l = pl.reciprocal(l_scr[...], approx=True)            # (Tq, heads)
        for h in range(heads):
            sl = slice(h * dh, (h + 1) * dh)
            acc_scr[:, sl] = acc_scr[:, sl] * inv_l[:, h:h + 1]
        # Output projection (all heads fused) + bias + residual + rescale.
        y = jnp.dot(acc_scr[...].astype(jnp.bfloat16), wo_ref[...],
                    preferred_element_type=jnp.float32)           # (Tq, D) f32
        y = y + bo_ref[...]
        if residual:
            # residual uses the bf16 x tile already resident in VMEM
            y = y + x_q_ref[0].astype(jnp.float32)
        y = y * out_scale
        o_ref[0] = y.astype(o_ref.dtype)


def _pick_tile(S, target):
    """Largest multiple-of-8 divisor of S not exceeding `target` (else S)."""
    if S <= target:
        return S
    for t in range(target, 7, -1):
        if S % t == 0 and t % 8 == 0:
            return t
    return S


def attention_pallas(x_nchw, params, *, heads, dim_head,
                     residual_connection=False, rescale_output_factor=1.0,
                     q_tile=256, kv_tile=512):
    """x_nchw: (B, C, H, W) with C == query_dim. Returns same shape/dtype."""
    B, C, H, W = x_nchw.shape
    S = H * W
    D = C
    inner = heads * dim_head
    scale = dim_head ** (-0.5)
    out_dtype = x_nchw.dtype

    TQ = _pick_tile(S, q_tile)
    TK = _pick_tile(S, kv_tile)
    nq = S // TQ
    nk = S // TK

    # Cache projected K/V (bf16) for the whole sequence in VMEM when it pays
    # off (more than one q tile) and fits a conservative VMEM budget.
    kv_cache_bytes = 2 * S * inner * 2
    cache_kv = (nq > 1) and (kv_cache_bytes <= 24 * 1024 * 1024)
    n_slots = nk if cache_kv else 1

    # NCHW -> (B, S, D)  (matches .view(B, C, H*W).transpose(1, 2)).
    # MXU operands downcast to bf16 in the wrapper (halves x DMA bytes too);
    # all accumulation / softmax statistics stay f32 inside the kernel.
    x3 = x_nchw.reshape(B, C, S).transpose(0, 2, 1).astype(jnp.bfloat16)
    wq_t = params["wq"].T.astype(jnp.bfloat16)      # (D, inner)
    wk_t = params["wk"].T.astype(jnp.bfloat16)      # (D, inner)
    wv_t = params["wv"].T.astype(jnp.bfloat16)      # (D, inner)
    wo_t = params["wo"].T.astype(jnp.bfloat16)      # (inner, D)
    bo2 = params["bo"].reshape(1, D).astype(jnp.float32)

    kernel = functools.partial(
        attn_kernel, heads=heads, dim_head=dim_head, scale=scale,
        residual=residual_connection, out_scale=1.0 / rescale_output_factor,
        cache_kv=cache_kv)

    if cache_kv:
        # kv x-tile is only consumed while filling the cache (qi == 0); for
        # qi > 0 keep the block index constant so Pallas does not re-DMA it.
        kv_index_map = lambda b, qi, ki: (b, jnp.where(qi == 0, ki, 0), 0)
        # Cross-q-tile reuse of the cache forbids sharding/reordering qi.
        dim_sem = ("parallel", "arbitrary", "arbitrary")
    else:
        kv_index_map = lambda b, qi, ki: (b, ki, 0)
        dim_sem = ("parallel", "parallel", "arbitrary")

    out3 = pl.pallas_call(
        kernel,
        out_shape=jax.ShapeDtypeStruct((B, S, D), out_dtype),
        grid_spec=pltpu.PrefetchScalarGridSpec(
            num_scalar_prefetch=0,
            grid=(B, nq, nk),
            in_specs=[
                # x as the query tile (constant across the kv axis -> 1 DMA
                # per q tile) and as the kv tile (see kv_index_map above).
                pl.BlockSpec((1, TQ, D), lambda b, qi, ki: (b, qi, 0)),
                pl.BlockSpec((1, TK, D), kv_index_map),
                # Full weight matrices, constant index_map -> fetched once,
                # resident in VMEM for the whole grid.
                pl.BlockSpec((D, inner), lambda b, qi, ki: (0, 0)),   # Wq^T
                pl.BlockSpec((D, inner), lambda b, qi, ki: (0, 0)),   # Wk^T
                pl.BlockSpec((D, inner), lambda b, qi, ki: (0, 0)),   # Wv^T
                pl.BlockSpec((inner, D), lambda b, qi, ki: (0, 0)),   # Wo^T
                pl.BlockSpec((1, D), lambda b, qi, ki: (0, 0)),       # out bias
            ],
            # NOTE: lane dim of the output block is D; for real diffusers
            # channel counts (>=320) this is lane-dense.
            out_specs=pl.BlockSpec((1, TQ, D), lambda b, qi, ki: (b, qi, 0)),
            scratch_shapes=[
                pltpu.VMEM((TQ, inner), jnp.bfloat16),       # scaled q tile
                pltpu.VMEM((TQ, heads), jnp.float32),        # running max / head
                pltpu.VMEM((TQ, heads), jnp.float32),        # running sum / head
                pltpu.VMEM((TQ, inner), jnp.float32),        # pre-projection acc
                pltpu.VMEM((n_slots, TK, inner), jnp.bfloat16),  # K cache
                pltpu.VMEM((n_slots, TK, inner), jnp.bfloat16),  # V cache
            ],
        ),
        compiler_params=pltpu.CompilerParams(
            dimension_semantics=dim_sem,
            vmem_limit_bytes=48 * 1024 * 1024),
    )(x3, x3, wq_t, wk_t, wv_t, wo_t, bo2)

    # (B, S, D) -> NCHW  (matches .transpose(-1, -2).reshape(B, C, H, W)).
    # Residual / rescale already fused in-kernel.
    return out3.transpose(0, 2, 1).reshape(B, C, H, W)


def attention_reference(x_nchw, params, *, heads, dim_head,
                        residual_connection=False, rescale_output_factor=1.0):
    """Pure-JAX f32 reference mirroring the PyTorch fast path."""
    B, C, H, W = x_nchw.shape
    S = H * W
    dh = dim_head
    x = x_nchw.reshape(B, C, S).transpose(0, 2, 1).astype(jnp.float32)   # (B,S,D)
    q = x @ params["wq"].astype(jnp.float32).T
    k = x @ params["wk"].astype(jnp.float32).T
    v = x @ params["wv"].astype(jnp.float32).T

    def split(t):
        return t.reshape(B, S, heads, dh).transpose(0, 2, 1, 3)          # (B,h,S,dh)

    q, k, v = split(q), split(k), split(v)
    scores = jnp.einsum("bhqd,bhkd->bhqk", q, k) * (dh ** -0.5)
    probs = jax.nn.softmax(scores, axis=-1)
    o = jnp.einsum("bhqk,bhkd->bhqd", probs, v)
    o = o.transpose(0, 2, 1, 3).reshape(B, S, heads * dh)
    o = o @ params["wo"].astype(jnp.float32).T + params["bo"].astype(jnp.float32)
    o = o.transpose(0, 2, 1).reshape(B, C, H, W)
    if residual_connection:
        o = o + x_nchw
    return (o / rescale_output_factor).astype(x_nchw.dtype)


if __name__ == "__main__":
    # Small config consistent with the module: query_dim = C = 32, heads=4,
    # dim_head=8; S = 8*8 = 64 with 32-wide q/kv tiles so the multi-tile
    # online-softmax + KV-cache path (grid = (2, 2, 2)) is exercised.
    B, C, H, W = 2, 32, 8, 8
    heads, dim_head = 4, 8
    inner = heads * dim_head
    query_dim = C

    key = jax.random.PRNGKey(0)
    kx, kq, kk, kv, ko, kb = jax.random.split(key, 6)

    x = jax.random.normal(kx, (B, C, H, W), dtype=jnp.float32)

    # nn.Linear-style init (uniform +/- 1/sqrt(fan_in)); q/k/v have bias=False.
    def lin_init(k_, out_f, in_f):
        bound = 1.0 / (in_f ** 0.5)
        return jax.random.uniform(k_, (out_f, in_f), jnp.float32, -bound, bound)

    params = {
        "wq": lin_init(kq, inner, query_dim),
        "wk": lin_init(kk, inner, query_dim),
        "wv": lin_init(kv, inner, query_dim),
        "wo": lin_init(ko, query_dim, inner),
        "bo": jax.random.uniform(kb, (query_dim,), jnp.float32,
                                 -1.0 / (inner ** 0.5), 1.0 / (inner ** 0.5)),
    }

    # 1) Multi-tile path (KV cache active, grid (2,2,2)), no residual/rescale.
    out = attention_pallas(x, params, heads=heads, dim_head=dim_head,
                           residual_connection=False, rescale_output_factor=1.0,
                           q_tile=32, kv_tile=32)
    out = jax.block_until_ready(out)
    ref = attention_reference(x, params, heads=heads, dim_head=dim_head)
    assert out.shape == (B, C, H, W)
    # bf16 MXU operands w/ f32 accumulation + approx reciprocal => loosened tol.
    assert jnp.allclose(out, ref, atol=3e-2, rtol=3e-2), "mismatch vs reference"

    # 2) Single-tile path (no cache) with fused residual + rescale.
    out2 = attention_pallas(x, params, heads=heads, dim_head=dim_head,
                            residual_connection=True, rescale_output_factor=2.0)
    out2 = jax.block_until_ready(out2)
    ref2 = attention_reference(x, params, heads=heads, dim_head=dim_head,
                               residual_connection=True,
                               rescale_output_factor=2.0)
    assert jnp.allclose(out2, ref2, atol=3e-2, rtol=3e-2), "mismatch (residual)"

    # TODO(synk): group_norm / spatial_norm / norm_cross / attention_mask /
    # dropout branches are disabled by the default Attention(...) constructor
    # args and are not implemented here.
    print("KERNEL_OK")
</pallas_src>

<mosaic_0001>
module attributes {stable_mosaic.version = 11 : i64} {
  func.func @attn_kernel(%arg0: i32, %arg1: i32, %arg2: i32, %arg3: memref<1x32x32xbf16, #tpu.memory_space<vmem>>, %arg4: memref<1x32x32xbf16, #tpu.memory_space<vmem>>, %arg5: memref<32x32xbf16, #tpu.memory_space<vmem>>, %arg6: memref<32x32xbf16, #tpu.memory_space<vmem>>, %arg7: memref<32x32xbf16, #tpu.memory_space<vmem>>, %arg8: memref<32x32xbf16, #tpu.memory_space<vmem>>, %arg9: memref<1x32xf32, #tpu.memory_space<vmem>>, %arg10: memref<1x32x32xf32, #tpu.memory_space<vmem>>, %arg11: memref<32x32xbf16, #tpu.memory_space<vmem>>, %arg12: memref<32x4xf32, #tpu.memory_space<vmem>>, %arg13: memref<32x4xf32, #tpu.memory_space<vmem>>, %arg14: memref<32x32xf32, #tpu.memory_space<vmem>>, %arg15: memref<2x32x32xbf16, #tpu.memory_space<vmem>>, %arg16: memref<2x32x32xbf16, #tpu.memory_space<vmem>>) attributes {dimension_semantics = [#tpu.dimension_semantics<parallel>, #tpu.dimension_semantics<arbitrary>, #tpu.dimension_semantics<arbitrary>], iteration_bounds = array<i64: 2, 2, 2>, scalar_prefetch = 0 : i64, scratch_operands = 6 : i64, tpu.core_type = #tpu.core_type<tc>, window_params = [{transform_indices = @transform_0, window_bounds = array<i64: 1, 32, 32>}, {transform_indices = @transform_1, window_bounds = array<i64: 1, 32, 32>}, {pipeline_mode = #tpu.pipeline_mode<synchronous>, transform_indices = @transform_2, window_bounds = array<i64: 32, 32>}, {pipeline_mode = #tpu.pipeline_mode<synchronous>, transform_indices = @transform_3, window_bounds = array<i64: 32, 32>}, {pipeline_mode = #tpu.pipeline_mode<synchronous>, transform_indices = @transform_4, window_bounds = array<i64: 32, 32>}, {pipeline_mode = #tpu.pipeline_mode<synchronous>, transform_indices = @transform_5, window_bounds = array<i64: 32, 32>}, {pipeline_mode = #tpu.pipeline_mode<synchronous>, transform_indices = @transform_6, window_bounds = array<i64: 1, 32>}, {transform_indices = @transform_7, window_bounds = array<i64: 1, 32, 32>}]} {
    %c0_i32 = arith.constant 0 : i32
    %0 = arith.cmpi eq, %arg2, %c0_i32 : i32
    %1 = arith.extui %0 : i1 to i32
    %c0_i32_0 = arith.constant 0 : i32
    %2 = arith.cmpi ne, %1, %c0_i32_0 : i32
    scf.if %2 {
      %c0_66 = arith.constant 0 : index
      %c0_67 = arith.constant 0 : index
      %c0_68 = arith.constant 0 : index
      %124 = vector.load %arg3[%c0_66, %c0_67, %c0_68] : memref<1x32x32xbf16, #tpu.memory_space<vmem>>, vector<1x32x32xbf16>
      %125 = vector.shape_cast %124 : vector<1x32x32xbf16> to vector<32x32xbf16>
      %c0_69 = arith.constant 0 : index
      %c0_70 = arith.constant 0 : index
      %126 = vector.load %arg5[%c0_69, %c0_70] : memref<32x32xbf16, #tpu.memory_space<vmem>>, vector<32x32xbf16>
      %cst_71 = arith.constant dense<0.000000e+00> : vector<32x32xf32>
      %127 = tpu.matmul %125, %126, %cst_71 {dimension_numbers = #tpu.dot_dimension_numbers<[1], [0], [0], [1], [0, 0, 1, 1], [], []>} : vector<32x32xbf16>, vector<32x32xbf16>, vector<32x32xf32> -> vector<32x32xf32>
      %cst_72 = arith.constant 0.353553385 : f32
      %128 = vector.broadcast %cst_72 : f32 to vector<32x32xf32>
      %129 = arith.mulf %127, %128 : vector<32x32xf32>
      %130 = arith.truncf %129 : vector<32x32xf32> to vector<32x32xbf16>
      %c0_73 = arith.constant 0 : index
      %c0_74 = arith.constant 0 : index
      %131 = vector.load %arg11[%c0_73, %c0_74] : memref<32x32xbf16, #tpu.memory_space<vmem>>, vector<32x32xbf16>
      tpu.vector_store %arg11[%c0_73, %c0_74], %130 {strides = array<i32>} : memref<32x32xbf16, #tpu.memory_space<vmem>>, vector<32x32xbf16>,
      %cst_75 = arith.constant 0xFF800000 : f32
      %132 = vector.broadcast %cst_75 : f32 to vector<32x4xf32>
      %c0_76 = arith.constant 0 : index
      %c0_77 = arith.constant 0 : index
      %133 = vector.load %arg12[%c0_76, %c0_77] : memref<32x4xf32, #tpu.memory_space<vmem>>, vector<32x4xf32>
      tpu.vector_store %arg12[%c0_76, %c0_77], %132 {strides = array<i32>} : memref<32x4xf32, #tpu.memory_space<vmem>>, vector<32x4xf32>,
      %cst_78 = arith.constant 0.000000e+00 : f32
      %134 = vector.broadcast %cst_78 : f32 to vector<32x4xf32>
      %c0_79 = arith.constant 0 : index
      %c0_80 = arith.constant 0 : index
      %135 = vector.load %arg13[%c0_79, %c0_80] : memref<32x4xf32, #tpu.memory_space<vmem>>, vector<32x4xf32>
      tpu.vector_store %arg13[%c0_79, %c0_80], %134 {strides = array<i32>} : memref<32x4xf32, #tpu.memory_space<vmem>>, vector<32x4xf32>,
      %cst_81 = arith.constant 0.000000e+00 : f32
      %136 = vector.broadcast %cst_81 : f32 to vector<32x32xf32>
      %c0_82 = arith.constant 0 : index
      %c0_83 = arith.constant 0 : index
      %137 = vector.load %arg14[%c0_82, %c0_83] : memref<32x32xf32, #tpu.memory_space<vmem>>, vector<32x32xf32>
      tpu.vector_store %arg14[%c0_82, %c0_83], %136 {strides = array<i32>} : memref<32x32xf32, #tpu.memory_space<vmem>>, vector<32x32xf32>,
    } else {
    }
    %c0_i32_1 = arith.constant 0 : i32
    %3 = arith.cmpi eq, %arg1, %c0_i32_1 : i32
    %4 = arith.extui %3 : i1 to i32
    %c0_i32_2 = arith.constant 0 : i32
    %5 = arith.cmpi ne, %4, %c0_i32_2 : i32
    scf.if %5 {
      %c0_66 = arith.constant 0 : index
      %c0_67 = arith.constant 0 : index
      %c0_68 = arith.constant 0 : index
      %124 = vector.load %arg4[%c0_66, %c0_67, %c0_68] : memref<1x32x32xbf16, #tpu.memory_space<vmem>>, vector<1x32x32xbf16>
      %125 = vector.shape_cast %124 : vector<1x32x32xbf16> to vector<32x32xbf16>
      %c0_69 = arith.constant 0 : index
      %c0_70 = arith.constant 0 : index
      %126 = vector.load %arg6[%c0_69, %c0_70] : memref<32x32xbf16, #tpu.memory_space<vmem>>, vector<32x32xbf16>
      %cst_71 = arith.constant dense<0.000000e+00> : vector<32x32xf32>
      %127 = tpu.matmul %125, %126, %cst_71 {dimension_numbers = #tpu.dot_dimension_numbers<[1], [0], [0], [1], [0, 0, 1, 1], [], []>} : vector<32x32xbf16>, vector<32x32xbf16>, vector<32x32xf32> -> vector<32x32xf32>
      %c0_72 = arith.constant 0 : index
      %c0_73 = arith.constant 0 : index
      %128 = vector.load %arg7[%c0_72, %c0_73] : memref<32x32xbf16, #tpu.memory_space<vmem>>, vector<32x32xbf16>
      %cst_74 = arith.constant dense<0.000000e+00> : vector<32x32xf32>
      %129 = tpu.matmul %125, %128, %cst_74 {dimension_numbers = #tpu.dot_dimension_numbers<[1], [0], [0], [1], [0, 0, 1, 1], [], []>} : vector<32x32xbf16>, vector<32x32xbf16>, vector<32x32xf32> -> vector<32x32xf32>
      %130 = arith.truncf %127 : vector<32x32xf32> to vector<32x32xbf16>
      %131 = arith.index_cast %arg2 : i32 to index
      %c0_75 = arith.constant 0 : index
      %c0_76 = arith.constant 0 : index
      %132 = vector.load %arg15[%131, %c0_75, %c0_76] : memref<2x32x32xbf16, #tpu.memory_space<vmem>>, vector<1x32x32xbf16>
      %133 = vector.shape_cast %132 : vector<1x32x32xbf16> to vector<32x32xbf16>
      %134 = vector.shape_cast %130 : vector<32x32xbf16> to vector<1x32x32xbf16>
      tpu.vector_store %arg15[%131, %c0_75, %c0_76], %134 {strides = array<i32>} : memref<2x32x32xbf16, #tpu.memory_space<vmem>>, vector<1x32x32xbf16>,
      %135 = arith.truncf %129 : vector<32x32xf32> to vector<32x32xbf16>
      %136 = arith.index_cast %arg2 : i32 to index
      %c0_77 = arith.constant 0 : index
      %c0_78 = arith.constant 0 : index
      %137 = vector.load %arg16[%136, %c0_77, %c0_78] : memref<2x32x32xbf16, #tpu.memory_space<vmem>>, vector<1x32x32xbf16>
      %138 = vector.shape_cast %137 : vector<1x32x32xbf16> to vector<32x32xbf16>
      %139 = vector.shape_cast %135 : vector<32x32xbf16> to vector<1x32x32xbf16>
      tpu.vector_store %arg16[%136, %c0_77, %c0_78], %139 {strides = array<i32>} : memref<2x32x32xbf16, #tpu.memory_space<vmem>>, vector<1x32x32xbf16>,
    } else {
    }
    %6 = arith.index_cast %arg2 : i32 to index
    %c0 = arith.constant 0 : index
    %c0_3 = arith.constant 0 : index
    %7 = vector.load %arg15[%6, %c0, %c0_3] : memref<2x32x32xbf16, #tpu.memory_space<vmem>>, vector<1x32x32xbf16>
    %8 = vector.shape_cast %7 : vector<1x32x32xbf16> to vector<32x32xbf16>
    %9 = arith.index_cast %arg2 : i32 to index
    %c0_4 = arith.constant 0 : index
    %c0_5 = arith.constant 0 : index
    %10 = vector.load %arg16[%9, %c0_4, %c0_5] : memref<2x32x32xbf16, #tpu.memory_space<vmem>>, vector<1x32x32xbf16>
    %11 = vector.shape_cast %10 : vector<1x32x32xbf16> to vector<32x32xbf16>
    %c0_6 = arith.constant 0 : index
    %c0_7 = arith.constant 0 : index
    %12 = vector.load %arg11[%c0_6, %c0_7] : memref<32x32xbf16, #tpu.memory_space<vmem>>, vector<32x32xbf16>
    %13 = vector.extract_strided_slice %12 {offsets = [0, 0], sizes = [32, 8], strides = [1, 1]} : vector<32x32xbf16> to vector<32x8xbf16>
    %14 = vector.extract_strided_slice %8 {offsets = [0, 0], sizes = [32, 8], strides = [1, 1]} : vector<32x32xbf16> to vector<32x8xbf16>
    %cst = arith.constant dense<0.000000e+00> : vector<32x32xf32>
    %15 = tpu.matmul %13, %14, %cst {dimension_numbers = #tpu.dot_dimension_numbers<[1], [1], [0], [0], [0, 0, 1, 0], [], []>} : vector<32x8xbf16>, vector<32x8xbf16>, vector<32x32xf32> -> vector<32x32xf32>
    %c0_8 = arith.constant 0 : index
    %c0_9 = arith.constant 0 : index
    %16 = vector.load %arg12[%c0_8, %c0_9] : memref<32x4xf32, #tpu.memory_space<vmem>>, vector<32x1xf32>
    %cst_10 = arith.constant dense<0xFF800000> : vector<32xf32>
    %17 = vector.multi_reduction <maximumf>, %15, %cst_10 [1] : vector<32x32xf32> to vector<32xf32>
    %18 = vector.shape_cast %17 : vector<32xf32> to vector<32x1xf32>
    %19 = arith.maximumf %16, %18 : vector<32x1xf32>
    %20 = arith.subf %16, %19 : vector<32x1xf32>
    %21 = math.exp %20 : vector<32x1xf32>
    %22 = vector.broadcast %19 : vector<32x1xf32> to vector<32x32xf32>
    %23 = arith.subf %15, %22 : vector<32x32xf32>
    %24 = math.exp %23 : vector<32x32xf32>
    %c0_11 = arith.constant 0 : index
    %c0_12 = arith.constant 0 : index
    %25 = vector.load %arg13[%c0_11, %c0_12] : memref<32x4xf32, #tpu.memory_space<vmem>>, vector<32x1xf32>
    %26 = arith.mulf %21, %25 : vector<32x1xf32>
    %cst_13 = arith.constant dense<0.000000e+00> : vector<32xf32>
    %27 = vector.multi_reduction <add>, %24, %cst_13 [1] : vector<32x32xf32> to vector<32xf32>
    %28 = vector.shape_cast %27 : vector<32xf32> to vector<32x1xf32>
    %29 = arith.addf %26, %28 : vector<32x1xf32>
    %c0_14 = arith.constant 0 : index
    %c0_15 = arith.constant 0 : index
    %30 = vector.load %arg13[%c0_14, %c0_15] : memref<32x4xf32, #tpu.memory_space<vmem>>, vector<32x1xf32>
    tpu.vector_store %arg13[%c0_14, %c0_15], %29 {strides = array<i32>} : memref<32x4xf32, #tpu.memory_space<vmem>>, vector<32x1xf32>,
    %c0_16 = arith.constant 0 : index
    %c0_17 = arith.constant 0 : index
    %31 = vector.load %arg14[%c0_16, %c0_17] : memref<32x32xf32, #tpu.memory_space<vmem>>, vector<32x8xf32>
    %32 = vector.broadcast %21 : vector<32x1xf32> to vector<32x8xf32>
    %33 = arith.mulf %32, %31 : vector<32x8xf32>
    %34 = arith.truncf %24 : vector<32x32xf32> to vector<32x32xbf16>
    %35 = vector.extract_strided_slice %11 {offsets = [0, 0], sizes = [32, 8], strides = [1, 1]} : vector<32x32xbf16> to vector<32x8xbf16>
    %cst_18 = arith.constant dense<0.000000e+00> : vector<32x8xf32>
    %36 = tpu.matmul %34, %35, %cst_18 {dimension_numbers = #tpu.dot_dimension_numbers<[1], [0], [0], [1], [0, 0, 1, 1], [], []>} : vector<32x32xbf16>, vector<32x8xbf16>, vector<32x8xf32> -> vector<32x8xf32>
    %37 = arith.addf %33, %36 : vector<32x8xf32>
    %c0_19 = arith.constant 0 : index
    %c0_20 = arith.constant 0 : index
    %38 = vector.load %arg14[%c0_19, %c0_20] : memref<32x32xf32, #tpu.memory_space<vmem>>, vector<32x8xf32>
    tpu.vector_store %arg14[%c0_19, %c0_20], %37 {strides = array<i32>} : memref<32x32xf32, #tpu.memory_space<vmem>>, vector<32x8xf32>,
    %c0_21 = arith.constant 0 : index
    %c0_22 = arith.constant 0 : index
    %39 = vector.load %arg12[%c0_21, %c0_22] : memref<32x4xf32, #tpu.memory_space<vmem>>, vector<32x1xf32>
    tpu.vector_store %arg12[%c0_21, %c0_22], %19 {strides = array<i32>} : memref<32x4xf32, #tpu.memory_space<vmem>>, vector<32x1xf32>,
    %40 = vector.extract_strided_slice %12 {offsets = [0, 8], sizes = [32, 8], strides = [1, 1]} : vector<32x32xbf16> to vector<32x8xbf16>
    %41 = vector.extract_strided_slice %8 {offsets = [0, 8], sizes = [32, 8], strides = [1, 1]} : vector<32x32xbf16> to vector<32x8xbf16>
    %cst_23 = arith.constant dense<0.000000e+00> : vector<32x32xf32>
    %42 = tpu.matmul %40, %41, %cst_23 {dimension_numbers = #tpu.dot_dimension_numbers<[1], [1], [0], [0], [0, 0, 1, 0], [], []>} : vector<32x8xbf16>, vector<32x8xbf16>, vector<32x32xf32> -> vector<32x32xf32>
    %c0_24 = arith.constant 0 : index
    %c1 = arith.constant 1 : index
    %43 = vector.load %arg12[%c0_24, %c1] : memref<32x4xf32, #tpu.memory_space<vmem>>, vector<32x1xf32>
    %cst_25 = arith.constant dense<0xFF800000> : vector<32xf32>
    %44 = vector.multi_reduction <maximumf>, %42, %cst_25 [1] : vector<32x32xf32> to vector<32xf32>
    %45 = vector.shape_cast %44 : vector<32xf32> to vector<32x1xf32>
    %46 = arith.maximumf %43, %45 : vector<32x1xf32>
    %47 = arith.subf %43, %46 : vector<32x1xf32>
    %48 = math.exp %47 : vector<32x1xf32>
    %49 = vector.broadcast %46 : vector<32x1xf32> to vector<32x32xf32>
    %50 = arith.subf %42, %49 : vector<32x32xf32>
    %51 = math.exp %50 : vector<32x32xf32>
    %c0_26 = arith.constant 0 : index
    %c1_27 = arith.constant 1 : index
    %52 = vector.load %arg13[%c0_26, %c1_27] : memref<32x4xf32, #tpu.memory_space<vmem>>, vector<32x1xf32>
    %53 = arith.mulf %48, %52 : vector<32x1xf32>
    %cst_28 = arith.constant dense<0.000000e+00> : vector<32xf32>
    %54 = vector.multi_reduction <add>, %51, %cst_28 [1] : vector<32x32xf32> to vector<32xf32>
    %55 = vector.shape_cast %54 : vector<32xf32> to vector<32x1xf32>
    %56 = arith.addf %53, %55 : vector<32x1xf32>
    %c0_29 = arith.constant 0 : index
    %c1_30 = arith.constant 1 : index
    %57 = vector.load %arg13[%c0_29, %c1_30] : memref<32x4xf32, #tpu.memory_space<vmem>>, vector<32x1xf32>
    tpu.vector_store %arg13[%c0_29, %c1_30], %56 {strides = array<i32>} : memref<32x4xf32, #tpu.memory_space<vmem>>, vector<32x1xf32>,
    %c0_31 = arith.constant 0 : index
    %c8 = arith.constant 8 : index
    %58 = vector.load %arg14[%c0_31, %c8] : memref<32x32xf32, #tpu.memory_space<vmem>>, vector<32x8xf32>
    %59 = vector.broadcast %48 : vector<32x1xf32> to vector<32x8xf32>
    %60 = arith.mulf %59, %58 : vector<32x8xf32>
    %61 = arith.truncf %51 : vector<32x32xf32> to vector<32x32xbf16>
    %62 = vector.extract_strided_slice %11 {offsets = [0, 8], sizes = [32, 8], strides = [1, 1]} : vector<32x32xbf16> to vector<32x8xbf16>
    %cst_32 = arith.constant dense<0.000000e+00> : vector<32x8xf32>
    %63 = tpu.matmul %61, %62, %cst_32 {dimension_numbers = #tpu.dot_dimension_numbers<[1], [0], [0], [1], [0, 0, 1, 1], [], []>} : vector<32x32xbf16>, vector<32x8xbf16>, vector<32x8xf32> -> vector<32x8xf32>
    %64 = arith.addf %60, %63 : vector<32x8xf32>
    %c0_33 = arith.constant 0 : index
    %c8_34 = arith.constant 8 : index
    %65 = vector.load %arg14[%c0_33, %c8_34] : memref<32x32xf32, #tpu.memory_space<vmem>>, vector<32x8xf32>
    tpu.vector_store %arg14[%c0_33, %c8_34], %64 {strides = array<i32>} : memref<32x32xf32, #tpu.memory_space<vmem>>, vector<32x8xf32>,
    %c0_35 = arith.constant 0 : index
    %c1_36 = arith.constant 1 : index
    %66 = vector.load %arg12[%c0_35, %c1_36] : memref<32x4xf32, #tpu.memory_space<vmem>>, vector<32x1xf32>
    tpu.vector_store %arg12[%c0_35, %c1_36], %46 {strides = array<i32>} : memref<32x4xf32, #tpu.memory_space<vmem>>, vector<32x1xf32>,
    %67 = vector.extract_strided_slice %12 {offsets = [0, 16], sizes = [32, 8], strides = [1, 1]} : vector<32x32xbf16> to vector<32x8xbf16>
    %68 = vector.extract_strided_slice %8 {offsets = [0, 16], sizes = [32, 8], strides = [1, 1]} : vector<32x32xbf16> to vector<32x8xbf16>
    %cst_37 = arith.constant dense<0.000000e+00> : vector<32x32xf32>
    %69 = tpu.matmul %67, %68, %cst_37 {dimension_numbers = #tpu.dot_dimension_numbers<[1], [1], [0], [0], [0, 0, 1, 0], [], []>} : vector<32x8xbf16>, vector<32x8xbf16>, vector<32x32xf32> -> vector<32x32xf32>
    %c0_38 = arith.constant 0 : index
    %c2 = arith.constant 2 : index
    %70 = vector.load %arg12[%c0_38, %c2] : memref<32x4xf32, #tpu.memory_space<vmem>>, vector<32x1xf32>
    %cst_39 = arith.constant dense<0xFF800000> : vector<32xf32>
    %71 = vector.multi_reduction <maximumf>, %69, %cst_39 [1] : vector<32x32xf32> to vector<32xf32>
    %72 = vector.shape_cast %71 : vector<32xf32> to vector<32x1xf32>
    %73 = arith.maximumf %70, %72 : vector<32x1xf32>
    %74 = arith.subf %70, %73 : vector<32x1xf32>
    %75 = math.exp %74 : vector<32x1xf32>
    %76 = vector.broadcast %73 : vector<32x1xf32> to vector<32x32xf32>
    %77 = arith.subf %69, %76 : vector<32x32xf32>
    %78 = math.exp %77 : vector<32x32xf32>
    %c0_40 = arith.constant 0 : index
    %c2_41 = arith.constant 2 : index
    %79 = vector.load %arg13[%c0_40, %c2_41] : memref<32x4xf32, #tpu.memory_space<vmem>>, vector<32x1xf32>
    %80 = arith.mulf %75, %79 : vector<32x1xf32>
    %cst_42 = arith.constant dense<0.000000e+00> : vector<32xf32>
    %81 = vector.multi_reduction <add>, %78, %cst_42 [1] : vector<32x32xf32> to vector<32xf32>
    %82 = vector.shape_cast %81 : vector<32xf32> to vector<32x1xf32>
    %83 = arith.addf %80, %82 : vector<32x1xf32>
    %c0_43 = arith.constant 0 : index
    %c2_44 = arith.constant 2 : index
    %84 = vector.load %arg13[%c0_43, %c2_44] : memref<32x4xf32, #tpu.memory_space<vmem>>, vector<32x1xf32>
    tpu.vector_store %arg13[%c0_43, %c2_44], %83 {strides = array<i32>} : memref<32x4xf32, #tpu.memory_space<vmem>>, vector<32x1xf32>,
    %c0_45 = arith.constant 0 : index
    %c16 = arith.constant 16 : index
    %85 = vector.load %arg14[%c0_45, %c16] : memref<32x32xf32, #tpu.memory_space<vmem>>, vector<32x8xf32>
    %86 = vector.broadcast %75 : vector<32x1xf32> to vector<32x8xf32>
    %87 = arith.mulf %86, %85 : vector<32x8xf32>
    %88 = arith.truncf %78 : vector<32x32xf32> to vector<32x32xbf16>
    %89 = vector.extract_strided_slice %11 {offsets = [0, 16], sizes = [32, 8], strides = [1, 1]} : vector<32x32xbf16> to vector<32x8xbf16>
    %cst_46 = arith.constant dense<0.000000e+00> : vector<32x8xf32>
    %90 = tpu.matmul %88, %89, %cst_46 {dimension_numbers = #tpu.dot_dimension_numbers<[1], [0], [0], [1], [0, 0, 1, 1], [], []>} : vector<32x32xbf16>, vector<32x8xbf16>, vector<32x8xf32> -> vector<32x8xf32>
    %91 = arith.addf %87, %90 : vector<32x8xf32>
    %c0_47 = arith.constant 0 : index
    %c16_48 = arith.constant 16 : index
    %92 = vector.load %arg14[%c0_47, %c16_48] : memref<32x32xf32, #tpu.memory_space<vmem>>, vector<32x8xf32>
    tpu.vector_store %arg14[%c0_47, %c16_48], %91 {strides = array<i32>} : memref<32x32xf32, #tpu.memory_space<vmem>>, vector<32x8xf32>,
    %c0_49 = arith.constant 0 : index
    %c2_50 = arith.constant 2 : index
    %93 = vector.load %arg12[%c0_49, %c2_50] : memref<32x4xf32, #tpu.memory_space<vmem>>, vector<32x1xf32>
    tpu.vector_store %arg12[%c0_49, %c2_50], %73 {strides = array<i32>} : memref<32x4xf32, #tpu.memory_space<vmem>>, vector<32x1xf32>,
    %94 = vector.extract_strided_slice %12 {offsets = [0, 24], sizes = [32, 8], strides = [1, 1]} : vector<32x32xbf16> to vector<32x8xbf16>
    %95 = vector.extract_strided_slice %8 {offsets = [0, 24], sizes = [32, 8], strides = [1, 1]} : vector<32x32xbf16> to vector<32x8xbf16>
    %cst_51 = arith.constant dense<0.000000e+00> : vector<32x32xf32>
    %96 = tpu.matmul %94, %95, %cst_51 {dimension_numbers = #tpu.dot_dimension_numbers<[1], [1], [0], [0], [0, 0, 1, 0], [], []>} : vector<32x8xbf16>, vector<32x8xbf16>, vector<32x32xf32> -> vector<32x32xf32>
    %c0_52 = arith.constant 0 : index
    %c3 = arith.constant 3 : index
    %97 = vector.load %arg12[%c0_52, %c3] : memref<32x4xf32, #tpu.memory_space<vmem>>, vector<32x1xf32>
    %cst_53 = arith.constant dense<0xFF800000> : vector<32xf32>
    %98 = vector.multi_reduction <maximumf>, %96, %cst_53 [1] : vector<32x32xf32> to vector<32xf32>
    %99 = vector.shape_cast %98 : vector<32xf32> to vector<32x1xf32>
    %100 = arith.maximumf %97, %99 : vector<32x1xf32>
    %101 = arith.subf %97, %100 : vector<32x1xf32>
    %102 = math.exp %101 : vector<32x1xf32>
    %103 = vector.broadcast %100 : vector<32x1xf32> to vector<32x32xf32>
    %104 = arith.subf %96, %103 : vector<32x32xf32>
    %105 = math.exp %104 : vector<32x32xf32>
    %c0_54 = arith.constant 0 : index
    %c3_55 = arith.constant 3 : index
    %106 = vector.load %arg13[%c0_54, %c3_55] : memref<32x4xf32, #tpu.memory_space<vmem>>, vector<32x1xf32>
    %107 = arith.mulf %102, %106 : vector<32x1xf32>
    %cst_56 = arith.constant dense<0.000000e+00> : vector<32xf32>
    %108 = vector.multi_reduction <add>, %105, %cst_56 [1] : vector<32x32xf32> to vector<32xf32>
    %109 = vector.shape_cast %108 : vector<32xf32> to vector<32x1xf32>
    %110 = arith.addf %107, %109 : vector<32x1xf32>
    %c0_57 = arith.constant 0 : index
    %c3_58 = arith.constant 3 : index
    %111 = vector.load %arg13[%c0_57, %c3_58] : memref<32x4xf32, #tpu.memory_space<vmem>>, vector<32x1xf32>
    tpu.vector_store %arg13[%c0_57, %c3_58], %110 {strides = array<i32>} : memref<32x4xf32, #tpu.memory_space<vmem>>, vector<32x1xf32>,
    %c0_59 = arith.constant 0 : index
    %c24 = arith.constant 24 : index
    %112 = vector.load %arg14[%c0_59, %c24] : memref<32x32xf32, #tpu.memory_space<vmem>>, vector<32x8xf32>
    %113 = vector.broadcast %102 : vector<32x1xf32> to vector<32x8xf32>
    %114 = arith.mulf %113, %112 : vector<32x8xf32>
    %115 = arith.truncf %105 : vector<32x32xf32> to vector<32x32xbf16>
    %116 = vector.extract_strided_slice %11 {offsets = [0, 24], sizes = [32, 8], strides = [1, 1]} : vector<32x32xbf16> to vector<32x8xbf16>
    %cst_60 = arith.constant dense<0.000000e+00> : vector<32x8xf32>
    %117 = tpu.matmul %115, %116, %cst_60 {dimension_numbers = #tpu.dot_dimension_numbers<[1], [0], [0], [1], [0, 0, 1, 1], [], []>} : vector<32x32xbf16>, vector<32x8xbf16>, vector<32x8xf32> -> vector<32x8xf32>
    %118 = arith.addf %114, %117 : vector<32x8xf32>
    %c0_61 = arith.constant 0 : index
    %c24_62 = arith.constant 24 : index
    %119 = vector.load %arg14[%c0_61, %c24_62] : memref<32x32xf32, #tpu.memory_space<vmem>>, vector<32x8xf32>
    tpu.vector_store %arg14[%c0_61, %c24_62], %118 {strides = array<i32>} : memref<32x32xf32, #tpu.memory_space<vmem>>, vector<32x8xf32>,
    %c0_63 = arith.constant 0 : index
    %c3_64 = arith.constant 3 : index
    %120 = vector.load %arg12[%c0_63, %c3_64] : memref<32x4xf32, #tpu.memory_space<vmem>>, vector<32x1xf32>
    tpu.vector_store %arg12[%c0_63, %c3_64], %100 {strides = array<i32>} : memref<32x4xf32, #tpu.memory_space<vmem>>, vector<32x1xf32>,
    %c1_i32 = arith.constant 1 : i32
    %121 = arith.cmpi eq, %arg2, %c1_i32 : i32
    %122 = arith.extui %121 : i1 to i32
    %c0_i32_65 = arith.constant 0 : i32
    %123 = arith.cmpi ne, %122, %c0_i32_65 : i32
    scf.if %123 {
      %c0_66 = arith.constant 0 : index
      %c0_67 = arith.constant 0 : index
      %124 = vector.load %arg13[%c0_66, %c0_67] : memref<32x4xf32, #tpu.memory_space<vmem>>, vector<32x4xf32>
      %125 = tpu.reciprocal %124 {approx = true} : vector<32x4xf32> -> vector<32x4xf32>
      %c0_68 = arith.constant 0 : index
      %c0_69 = arith.constant 0 : index
      %126 = vector.load %arg14[%c0_68, %c0_69] : memref<32x32xf32, #tpu.memory_space<vmem>>, vector<32x8xf32>
      %127 = vector.extract_strided_slice %125 {offsets = [0, 0], sizes = [32, 1], strides = [1, 1]} : vector<32x4xf32> to vector<32x1xf32>
      %128 = vector.broadcast %127 : vector<32x1xf32> to vector<32x8xf32>
      %129 = arith.mulf %126, %128 : vector<32x8xf32>
      %c0_70 = arith.constant 0 : index
      %c0_71 = arith.constant 0 : index
      %130 = vector.load %arg14[%c0_70, %c0_71] : memref<32x32xf32, #tpu.memory_space<vmem>>, vector<32x8xf32>
      tpu.vector_store %arg14[%c0_70, %c0_71], %129 {strides = array<i32>} : memref<32x32xf32, #tpu.memory_space<vmem>>, vector<32x8xf32>,
      %c0_72 = arith.constant 0 : index
      %c8_73 = arith.constant 8 : index
      %131 = vector.load %arg14[%c0_72, %c8_73] : memref<32x32xf32, #tpu.memory_space<vmem>>, vector<32x8xf32>
      %132 = vector.extract_strided_slice %125 {offsets = [0, 1], sizes = [32, 1], strides = [1, 1]} : vector<32x4xf32> to vector<32x1xf32>
      %133 = vector.broadcast %132 : vector<32x1xf32> to vector<32x8xf32>
      %134 = arith.mulf %131, %133 : vector<32x8xf32>
      %c0_74 = arith.constant 0 : index
      %c8_75 = arith.constant 8 : index
      %135 = vector.load %arg14[%c0_74, %c8_75] : memref<32x32xf32, #tpu.memory_space<vmem>>, vector<32x8xf32>
      tpu.vector_store %arg14[%c0_74, %c8_75], %134 {strides = array<i32>} : memref<32x32xf32, #tpu.memory_space<vmem>>, vector<32x8xf32>,
      %c0_76 = arith.constant 0 : index
      %c16_77 = arith.constant 16 : index
      %136 = vector.load %arg14[%c0_76, %c16_77] : memref<32x32xf32, #tpu.memory_space<vmem>>, vector<32x8xf32>
      %137 = vector.extract_strided_slice %125 {offsets = [0, 2], sizes = [32, 1], strides = [1, 1]} : vector<32x4xf32> to vector<32x1xf32>
      %138 = vector.broadcast %137 : vector<32x1xf32> to vector<32x8xf32>
      %139 = arith.mulf %136, %138 : vector<32x8xf32>
      %c0_78 = arith.constant 0 : index
      %c16_79 = arith.constant 16 : index
      %140 = vector.load %arg14[%c0_78, %c16_79] : memref<32x32xf32, #tpu.memory_space<vmem>>, vector<32x8xf32>
      tpu.vector_store %arg14[%c0_78, %c16_79], %139 {strides = array<i32>} : memref<32x32xf32, #tpu.memory_space<vmem>>, vector<32x8xf32>,
      %c0_80 = arith.constant 0 : index
      %c24_81 = arith.constant 24 : index
      %141 = vector.load %arg14[%c0_80, %c24_81] : memref<32x32xf32, #tpu.memory_space<vmem>>, vector<32x8xf32>
      %142 = vector.extract_strided_slice %125 {offsets = [0, 3], sizes = [32, 1], strides = [1, 1]} : vector<32x4xf32> to vector<32x1xf32>
      %143 = vector.broadcast %142 : vector<32x1xf32> to vector<32x8xf32>
      %144 = arith.mulf %141, %143 : vector<32x8xf32>
      %c0_82 = arith.constant 0 : index
      %c24_83 = arith.constant 24 : index
      %145 = vector.load %arg14[%c0_82, %c24_83] : memref<32x32xf32, #tpu.memory_space<vmem>>, vector<32x8xf32>
      tpu.vector_store %arg14[%c0_82, %c24_83], %144 {strides = array<i32>} : memref<32x32xf32, #tpu.memory_space<vmem>>, vector<32x8xf32>,
      %c0_84 = arith.constant 0 : index
      %c0_85 = arith.constant 0 : index
      %146 = vector.load %arg14[%c0_84, %c0_85] : memref<32x32xf32, #tpu.memory_space<vmem>>, vector<32x32xf32>
      %147 = arith.truncf %146 : vector<32x32xf32> to vector<32x32xbf16>
      %c0_86 = arith.constant 0 : index
      %c0_87 = arith.constant 0 : index
      %148 = vector.load %arg8[%c0_86, %c0_87] : memref<32x32xbf16, #tpu.memory_space<vmem>>, vector<32x32xbf16>
      %cst_88 = arith.constant dense<0.000000e+00> : vector<32x32xf32>
      %149 = tpu.matmul %147, %148, %cst_88 {dimension_numbers = #tpu.dot_dimension_numbers<[1], [0], [0], [1], [0, 0, 1, 1], [], []>} : vector<32x32xbf16>, vector<32x32xbf16>, vector<32x32xf32> -> vector<32x32xf32>
      %c0_89 = arith.constant 0 : index
      %c0_90 = arith.constant 0 : index
      %150 = vector.load %arg9[%c0_89, %c0_90] : memref<1x32xf32, #tpu.memory_space<vmem>>, vector<1x32xf32>
      %151 = vector.broadcast %150 : vector<1x32xf32> to vector<32x32xf32>
      %152 = arith.addf %149, %151 : vector<32x32xf32>
      %cst_91 = arith.constant 1.000000e+00 : f32
      %153 = vector.broadcast %cst_91 : f32 to vector<32x32xf32>
      %154 = arith.mulf %152, %153 : vector<32x32xf32>
      %c0_92 = arith.constant 0 : index
      %c0_93 = arith.constant 0 : index
      %c0_94 = arith.constant 0 : index
      %155 = vector.load %arg10[%c0_92, %c0_93, %c0_94] : memref<1x32x32xf32, #tpu.memory_space<vmem>>, vector<1x32x32xf32>
      %156 = vector.shape_cast %155 : vector<1x32x32xf32> to vector<32x32xf32>
      %157 = vector.shape_cast %154 : vector<32x32xf32> to vector<1x32x32xf32>
      tpu.vector_store %arg10[%c0_92, %c0_93, %c0_94], %157 {strides = array<i32>} : memref<1x32x32xf32, #tpu.memory_space<vmem>>, vector<1x32x32xf32>,
    } else {
    }
    return
  }
  func.func @transform_0(%arg0: i32, %arg1: i32, %arg2: i32) -> (i32, i32, i32) {
    %c0_i32 = arith.constant 0 : i32
    %c0_i32_0 = arith.constant 0 : i32
    return %arg0, %arg1, %c0_i32 : i32, i32, i32
  }
  func.func @transform_1(%arg0: i32, %arg1: i32, %arg2: i32) -> (i32, i32, i32) {
    %c0_i32 = arith.constant 0 : i32
    %0 = arith.cmpi eq, %arg1, %c0_i32 : i32
    %c0_i32_0 = arith.constant 0 : i32
    %1 = arith.select %0, %arg2, %c0_i32_0 : i32
    %c0_i32_1 = arith.constant 0 : i32
    %c0_i32_2 = arith.constant 0 : i32
    return %arg0, %1, %c0_i32_1 : i32, i32, i32
  }
  func.func @transform_2(%arg0: i32, %arg1: i32, %arg2: i32) -> (i32, i32) {
    %c0_i32 = arith.constant 0 : i32
    %c0_i32_0 = arith.constant 0 : i32
    %c0_i32_1 = arith.constant 0 : i32
    return %c0_i32, %c0_i32_0 : i32, i32
  }
  func.func @transform_3(%arg0: i32, %arg1: i32, %arg2: i32) -> (i32, i32) {
    %c0_i32 = arith.constant 0 : i32
    %c0_i32_0 = arith.constant 0 : i32
    %c0_i32_1 = arith.constant 0 : i32
    return %c0_i32, %c0_i32_0 : i32, i32
  }
  func.func @transform_4(%arg0: i32, %arg1: i32, %arg2: i32) -> (i32, i32) {
    %c0_i32 = arith.constant 0 : i32
    %c0_i32_0 = arith.constant 0 : i32
    %c0_i32_1 = arith.constant 0 : i32
    return %c0_i32, %c0_i32_0 : i32, i32
  }
  func.func @transform_5(%arg0: i32, %arg1: i32, %arg2: i32) -> (i32, i32) {
    %c0_i32 = arith.constant 0 : i32
    %c0_i32_0 = arith.constant 0 : i32
    %c0_i32_1 = arith.constant 0 : i32
    return %c0_i32, %c0_i32_0 : i32, i32
  }
  func.func @transform_6(%arg0: i32, %arg1: i32, %arg2: i32) -> (i32, i32) {
    %c0_i32 = arith.constant 0 : i32
    %c0_i32_0 = arith.constant 0 : i32
    %c0_i32_1 = arith.constant 0 : i32
    return %c0_i32, %c0_i32_0 : i32, i32
  }
  func.func @transform_7(%arg0: i32, %arg1: i32, %arg2: i32) -> (i32, i32, i32) {
    %c0_i32 = arith.constant 0 : i32
    %c0_i32_0 = arith.constant 0 : i32
    return %arg0, %arg1, %c0_i32 : i32, i32, i32
  }
}

</mosaic_0001>

<llo_original>
// kernel: tpu_custom_call.1
$region0: #{tpu_custom_call.1}
  #allocation0 [shape = 'u32[]', space=smem, size = 0x4, offset = 0x4, fixed_abs, tag = 'smem constant byte address 0x4 - core index']
  #allocation1 [shape = 'u32[144,128]{1,0:T(1,128)}', space=vmem, size = 0x12000, scoped, tag = 'internal scratch']
  #allocation2 [shape = 'bf16[32,32]{1,0:T(16,128)(2,1)}', space=vmem, size = 0x2000, scoped, tag = 'scratch operand']
  #allocation3 [shape = 'f32[32,4]{1,0:T(8,128)}', space=vmem, size = 0x4000, scoped, tag = 'scratch operand']
  #allocation4 [shape = 'f32[32,4]{1,0:T(8,128)}', space=vmem, size = 0x4000, scoped, tag = 'scratch operand']
  #allocation5 [shape = 'f32[32,32]{1,0:T(8,128)}', space=vmem, size = 0x4000, scoped, tag = 'scratch operand']
  #allocation6 [shape = 'bf16[2,32,32]{2,1,0:T(16,128)(2,1)}', space=vmem, size = 0x4000, scoped, tag = 'scratch operand']
  #allocation7 [shape = 'bf16[2,32,32]{2,1,0:T(16,128)(2,1)}', space=vmem, size = 0x4000, scoped, tag = 'scratch operand']
  %s0 = inlined_call_operand.vmem [shape: bf16[2,64,32], index: 0, kind: input, shape index: {}]
  %s1 = inlined_call_operand.vmem [shape: bf16[2,64,32], index: 1, kind: input, shape index: {}]
  %s2 = inlined_call_operand.vmem [shape: bf16[32,32], index: 2, kind: input, shape index: {}]
  %s3 = inlined_call_operand.vmem [shape: bf16[32,32], index: 3, kind: input, shape index: {}]
  %s4 = inlined_call_operand.vmem [shape: bf16[32,32], index: 4, kind: input, shape index: {}]
  %s5 = inlined_call_operand.vmem [shape: bf16[32,32], index: 5, kind: input, shape index: {}]
  %s6 = inlined_call_operand.vmem [shape: f32[1,32], index: 6, kind: input, shape index: {}]
  %s7 = inlined_call_operand.vmem [shape: f32[2,64,32], index: 7, kind: output, shape index: {}]
  %s8 = sld [smem:[#allocation0]]
  $region73: #{tpu_custom_call.1} parent=0
    _
  %s10 = ssub.s32 1, %s8
  %s11 = scalar_select 0, %s10, %s8
  loop: start=0, step=1, limit=10
  $region2: #{tpu_custom_call.1} parent=0 // loop_pre_header
    _
  $region3: #{tpu_custom_call.1} parent=0 // loop_header
    %s13 = sphi 0, %s17
    %p14 = scmp.ge.s32.totalorder %s13, 10
    %s20 = sphi 0, %s39
    %s21 = sphi 0, %s35
    %s22 = sphi 0, %s31
    %s23 = sphi 0, %s20
    %s24 = sphi 0, %s21
    %s25 = sphi 0, %s22
    %s26 = sphi 0, %s23
    %s27 = sphi 0, %s24
    %s28 = sphi 0, %s25
    %s44 = sphi 0, %s46
    %s47 = sphi 0, %s44
    %s48 = sphi 0, %s47
    %s64 = sphi 0, %s48
    %s76 = sphi 0, %s78
    %s79 = sphi 0, %s76
    %s80 = sphi 0, %s79
    %s96 = sphi 0, %s80
    %s100 = sphi 0, %s100
    %s102 = sphi 0, %s100
    %s103 = sphi 0, %s102
    %s117 = sphi 0, %s103
    %s121 = sphi 0, %s121
    %s123 = sphi 0, %s121
    %s124 = sphi 0, %s123
    %s138 = sphi 0, %s124
    %s142 = sphi 0, %s142
    %s144 = sphi 0, %s142
    %s145 = sphi 0, %s144
    %s159 = sphi 0, %s145
    %s163 = sphi 0, %s163
    %s165 = sphi 0, %s163
    %s166 = sphi 0, %s165
    %s180 = sphi 0, %s166
    %s184 = sphi 0, %s184
    %s186 = sphi 0, %s184
    %s187 = sphi 0, %s186
    %s201 = sphi 0, %s187
    %s209 = sphi 0, %s211
    %s212 = sphi 0, %s209
    %s213 = sphi 0, %s212
    %s229 = sphi 0, %s213
  $region4: #{tpu_custom_call.1} parent=0 // loop_header_branch
    %16 = sbr.rel (%p14) target = $region8
  $region5: #{tpu_custom_call.1} parent=0 // loop_body
    %s18 = ssub.s32 %s13, 1
    %s19 = ssub.s32 %s13, 2
    %s29 = sadd.s32 1, %s22
    %p30 = scmp.ge.s32.totalorder %s29, 2
    %s31 = scalar_select %p30, 0, %s29
    %s32 = sadd.s32 1, %s21
    %s33 = scalar_select %p30, %s32, %s21
    %p34 = scmp.ge.s32.totalorder %s33, 2
    %s35 = scalar_select %p34, 0, %s33
    %s36 = sadd.s32 1, %s20
    %s37 = scalar_select %p34, %s36, %s20
    %p38 = scmp.ge.s32.totalorder %s37, 2
    %s39 = scalar_select %p38, 0, %s37
    %s40 = ssub.s32 %s20, %s39
    %s41 = ssub.s32 %s21, %s35
    %s42 = sor.u32 %s40, %s41
    %p43 = scmp.eq.s32.totalorder %s42, 0
    %s45 = sadd.s32 %s44, 1
    %s46 = scalar_select %p43, %s44, %s45
    %p49 = pneg %p43
    %p50 = scmp.eq.s32.totalorder %s13, 7
    %p51 = por %p49, %p50
    %p52 = scmp.ne.s32.totalorder %s44, %s47
    %p53 = scmp.eq.s32.totalorder %s13, 0
    %p54 = por %p52, %p53
    %p55 = scmp.ne.s32.totalorder %s44, %s47
    %p56 = scmp.eq.s32.totalorder %s18, 7
    %p57 = por %p55, %p56
    %p58 = scmp.ne.s32.totalorder %s47, %s48
    %p59 = scmp.eq.s32.totalorder %s18, 0
    %p60 = por %p58, %p59
    %p61 = scmp.ne.s32.totalorder %s47, %s48
    %p62 = scmp.eq.s32.totalorder %s19, 7
    %p63 = por %p61, %p62
    %p65 = scmp.ne.s32.totalorder %s48, %s64
    %p66 = scmp.eq.s32.totalorder %s19, 0
    %p67 = por %p65, %p66
    %p68 = scmp.eq.s32.totalorder %s21, 0
    %s69 = scalar_select %p68, %s22, 0
    %p70 = scmp.eq.s32.totalorder %s35, 0
    %s71 = scalar_select %p70, %s31, 0
    %s72 = ssub.s32 %s20, %s39
    %s73 = ssub.s32 %s69, %s71
    %s74 = sor.u32 %s72, %s73
    %p75 = scmp.eq.s32.totalorder %s74, 0
    %s77 = sadd.s32 %s76, 1
    %s78 = scalar_select %p75, %s76, %s77
    %p81 = pneg %p75
    %p82 = scmp.eq.s32.totalorder %s13, 7
    %p83 = por %p81, %p82
    %p84 = scmp.ne.s32.totalorder %s76, %s79
    %p85 = scmp.eq.s32.totalorder %s13, 0
    %p86 = por %p84, %p85
    %p87 = scmp.ne.s32.totalorder %s76, %s79
    %p88 = scmp.eq.s32.totalorder %s18, 7
    %p89 = por %p87, %p88
    %p90 = scmp.ne.s32.totalorder %s79, %s80
    %p91 = scmp.eq.s32.totalorder %s18, 0
    %p92 = por %p90, %p91
    %p93 = scmp.ne.s32.totalorder %s79, %s80
    %p94 = scmp.eq.s32.totalorder %s19, 7
    %p95 = por %p93, %p94
    %p97 = scmp.ne.s32.totalorder %s80, %s96
    %p98 = scmp.eq.s32.totalorder %s19, 0
    %p99 = por %p97, %p98
    %s101 = sadd.s32 %s100, 1
    %p104 = scmp.eq.s32.totalorder %s13, 7
    %p105 = scmp.ne.s32.totalorder %s100, %s102
    %p106 = scmp.eq.s32.totalorder %s13, 0
    %p107 = por %p105, %p106
    %p108 = scmp.ne.s32.totalorder %s100, %s102
    %p109 = scmp.eq.s32.totalorder %s18, 7
    %p110 = por %p108, %p109
    %p111 = scmp.ne.s32.totalorder %s102, %s103
    %p112 = scmp.eq.s32.totalorder %s18, 0
    %p113 = por %p111, %p112
    %p114 = scmp.ne.s32.totalorder %s102, %s103
    %p115 = scmp.eq.s32.totalorder %s19, 7
    %p116 = por %p114, %p115
    %p118 = scmp.ne.s32.totalorder %s103, %s117
    %p119 = scmp.eq.s32.totalorder %s19, 0
    %p120 = por %p118, %p119
    %s122 = sadd.s32 %s121, 1
    %p125 = scmp.eq.s32.totalorder %s13, 7
    %p126 = scmp.ne.s32.totalorder %s121, %s123
    %p127 = scmp.eq.s32.totalorder %s13, 0
    %p128 = por %p126, %p127
    %p129 = scmp.ne.s32.totalorder %s121, %s123
    %p130 = scmp.eq.s32.totalorder %s18, 7
    %p131 = por %p129, %p130
    %p132 = scmp.ne.s32.totalorder %s123, %s124
    %p133 = scmp.eq.s32.totalorder %s18, 0
    %p134 = por %p132, %p133
    %p135 = scmp.ne.s32.totalorder %s123, %s124
    %p136 = scmp.eq.s32.totalorder %s19, 7
    %p137 = por %p135, %p136
    %p139 = scmp.ne.s32.totalorder %s124, %s138
    %p140 = scmp.eq.s32.totalorder %s19, 0
    %p141 = por %p139, %p140
    %s143 = sadd.s32 %s142, 1
    %p146 = scmp.eq.s32.totalorder %s13, 7
    %p147 = scmp.ne.s32.totalorder %s142, %s144
    %p148 = scmp.eq.s32.totalorder %s13, 0
    %p149 = por %p147, %p148
    %p150 = scmp.ne.s32.totalorder %s142, %s144
    %p151 = scmp.eq.s32.totalorder %s18, 7
    %p152 = por %p150, %p151
    %p153 = scmp.ne.s32.totalorder %s144, %s145
    %p154 = scmp.eq.s32.totalorder %s18, 0
    %p155 = por %p153, %p154
    %p156 = scmp.ne.s32.totalorder %s144, %s145
    %p157 = scmp.eq.s32.totalorder %s19, 7
    %p158 = por %p156, %p157
    %p160 = scmp.ne.s32.totalorder %s145, %s159
    %p161 = scmp.eq.s32.totalorder %s19, 0
    %p162 = por %p160, %p161
    %s164 = sadd.s32 %s163, 1
    %p167 = scmp.eq.s32.totalorder %s13, 7
    %p168 = scmp.ne.s32.totalorder %s163, %s165
    %p169 = scmp.eq.s32.totalorder %s13, 0
    %p170 = por %p168, %p169
    %p171 = scmp.ne.s32.totalorder %s163, %s165
    %p172 = scmp.eq.s32.totalorder %s18, 7
    %p173 = por %p171, %p172
    %p174 = scmp.ne.s32.totalorder %s165, %s166
    %p175 = scmp.eq.s32.totalorder %s18, 0
    %p176 = por %p174, %p175
    %p177 = scmp.ne.s32.totalorder %s165, %s166
    %p178 = scmp.eq.s32.totalorder %s19, 7
    %p179 = por %p177, %p178
    %p181 = scmp.ne.s32.totalorder %s166, %s180
    %p182 = scmp.eq.s32.totalorder %s19, 0
    %p183 = por %p181, %p182
    %s185 = sadd.s32 %s184, 1
    %p188 = scmp.eq.s32.totalorder %s13, 7
    %p189 = scmp.ne.s32.totalorder %s184, %s186
    %p190 = scmp.eq.s32.totalorder %s13, 0
    %p191 = por %p189, %p190
    %p192 = scmp.ne.s32.totalorder %s184, %s186
    %p193 = scmp.eq.s32.totalorder %s18, 7
    %p194 = por %p192, %p193
    %p195 = scmp.ne.s32.totalorder %s186, %s187
    %p196 = scmp.eq.s32.totalorder %s18, 0
    %p197 = por %p195, %p196
    %p198 = scmp.ne.s32.totalorder %s186, %s187
    %p199 = scmp.eq.s32.totalorder %s19, 7
    %p200 = por %p198, %p199
    %p202 = scmp.ne.s32.totalorder %s187, %s201
    %p203 = scmp.eq.s32.totalorder %s19, 0
    %p204 = por %p202, %p203
    %s205 = ssub.s32 %s20, %s39
    %s206 = ssub.s32 %s21, %s35
    %s207 = sor.u32 %s205, %s206
    %p208 = scmp.eq.s32.totalorder %s207, 0
    %s210 = sadd.s32 %s209, 1
    %s211 = scalar_select %p208, %s209, %s210
    %p214 = pneg %p208
    %p215 = scmp.eq.s32.totalorder %s13, 7
    %p216 = por %p214, %p215
    %p217 = scmp.ne.s32.totalorder %s209, %s212
    %p218 = scmp.eq.s32.totalorder %s13, 0
    %p219 = por %p217, %p218
    %p220 = scmp.ne.s32.totalorder %s209, %s212
    %p221 = scmp.eq.s32.totalorder %s18, 7
    %p222 = por %p220, %p221
    %p223 = scmp.ne.s32.totalorder %s212, %s213
    %p224 = scmp.eq.s32.totalorder %s18, 0
    %p225 = por %p223, %p224
    %p226 = scmp.ne.s32.totalorder %s212, %s213
    %p227 = scmp.eq.s32.totalorder %s19, 7
    %p228 = por %p226, %p227
    %p230 = scmp.ne.s32.totalorder %s213, %s229
    %p231 = scmp.eq.s32.totalorder %s19, 0
    %p232 = por %p230, %p231
    %p233 = scmp.le.s32.totalorder 1, %s13
    %p234 = scmp.lt.s32.totalorder %s13, 9
    %p235 = pnand %p233, %p234
    %p236 = pneg %p235
    // Predicated region
    $region9: #{tpu_custom_call.1} parent=5 // pred_check
      _
    $region10: #{tpu_custom_call.1} parent=5 // pred_check_branch
      %238 = sbr.rel (%p235) target = $region12
    $region11: #{tpu_custom_call.1} parent=5 // pred_region
      %s239 = ssub.s32 %s13, 1
      // Predicated region
      $region13: #{tpu_custom_call.1} parent=11 // pred_check
        %p240 = pneg %p113
      $region14: #{tpu_custom_call.1} parent=11 // pred_check_branch
        %242 = sbr.rel (%p240) target = $region16
      $region15: #{tpu_custom_call.1} parent=11 // pred_region
        _
      $region16: #{tpu_custom_call.1} parent=11 // pred_fallthru
        _
      // Predicated region
      $region17: #{tpu_custom_call.1} parent=11 // pred_check
        %p243 = pneg %p134
      $region18: #{tpu_custom_call.1} parent=11 // pred_check_branch
        %245 = sbr.rel (%p243) target = $region20
      $region19: #{tpu_custom_call.1} parent=11 // pred_region
        _
      $region20: #{tpu_custom_call.1} parent=11 // pred_fallthru
        _
      // Predicated region
      $region21: #{tpu_custom_call.1} parent=11 // pred_check
        %p246 = pneg %p155
      $region22: #{tpu_custom_call.1} parent=11 // pred_check_branch
        %248 = sbr.rel (%p246) target = $region24
      $region23: #{tpu_custom_call.1} parent=11 // pred_region
        _
      $region24: #{tpu_custom_call.1} parent=11 // pred_fallthru
        _
      // Predicated region
      $region25: #{tpu_custom_call.1} parent=11 // pred_check
        %p249 = pneg %p176
      $region26: #{tpu_custom_call.1} parent=11 // pred_check_branch
        %251 = sbr.rel (%p249) target = $region28
      $region27: #{tpu_custom_call.1} parent=11 // pred_region
        _
      $region28: #{tpu_custom_call.1} parent=11 // pred_fallthru
        _
      // Predicated region
      $region29: #{tpu_custom_call.1} parent=11 // pred_check
        %p252 = pneg %p197
      $region30: #{tpu_custom_call.1} parent=11 // pred_check_branch
        %254 = sbr.rel (%p252) target = $region32
      $region31: #{tpu_custom_call.1} parent=11 // pred_region
        _
      $region32: #{tpu_custom_call.1} parent=11 // pred_fallthru
        _
    $region12: #{tpu_custom_call.1} parent=5 // pred_fallthru
      _
    %p255 = scmp.lt.s32.totalorder %s13, 8
    // Predicated region
    $region33: #{tpu_custom_call.1} parent=5 // pred_check
      %p256 = pneg %p255
    $region34: #{tpu_custom_call.1} parent=5 // pred_check_branch
      %258 = sbr.rel (%p256) target = $region36
    $region35: #{tpu_custom_call.1} parent=5 // pred_region
      // Predicated region
      $region37: #{tpu_custom_call.1} parent=35 // pred_check
        %p259 = pneg %p54
      $region38: #{tpu_custom_call.1} parent=35 // pred_check_branch
        %261 = sbr.rel (%p259) target = $region40
      $region39: #{tpu_custom_call.1} parent=35 // pred_region
        %s262 = smul.u32 4, %s21
        %p263 = scmp.lt.s32.totalorder %s20, 1
        %s264 = scalar_select %p263, %s20, 1
        %p265 = scmp.lt.s32.totalorder %s262, 7
        %s266 = scalar_select %p265, %s262, 7
        %s267 = smul.addr %s264, 8
        %s268 = sadd.s32 %s266, %s267
        %s269 = smul.addr %s268, 4
        %s270 = scalar_lea.vmem %s0, %s269
        %s271 = smul.u32 4, %s21
      $region40: #{tpu_custom_call.1} parent=35 // pred_fallthru
        _
      // Predicated region
      $region41: #{tpu_custom_call.1} parent=35 // pred_check
        %p272 = pneg %p86
      $region42: #{tpu_custom_call.1} parent=35 // pred_check_branch
        %274 = sbr.rel (%p272) target = $region44
      $region43: #{tpu_custom_call.1} parent=35 // pred_region
        %p275 = scmp.eq.s32.totalorder %s21, 0
        %s276 = scalar_select %p275, %s22, 0
        %s277 = smul.u32 4, %s276
        %p278 = scmp.lt.s32.totalorder %s20, 1
        %s279 = scalar_select %p278, %s20, 1
        %p280 = scmp.lt.s32.totalorder %s277, 7
        %s281 = scalar_select %p280, %s277, 7
        %s282 = smul.addr %s279, 8
        %s283 = sadd.s32 %s281, %s282
        %s284 = smul.addr %s283, 4
        %s285 = scalar_lea.vmem %s1, %s284
        %p286 = scmp.eq.s32.totalorder %s21, 0
        %s287 = scalar_select %p286, %s22, 0
        %s288 = smul.u32 4, %s287
      $region44: #{tpu_custom_call.1} parent=35 // pred_fallthru
        _
    $region36: #{tpu_custom_call.1} parent=5 // pred_fallthru
      _
    %p289 = scmp.le.s32.totalorder 1, %s13
    %p290 = scmp.lt.s32.totalorder %s13, 9
    %p291 = pnand %p289, %p290
    %p292 = pneg %p291
    // Predicated region
    $region45: #{tpu_custom_call.1} parent=5 // pred_check
      _
    $region46: #{tpu_custom_call.1} parent=5 // pred_check_branch
      %294 = sbr.rel (%p291) target = $region48
    $region47: #{tpu_custom_call.1} parent=5 // pred_region
      %s295 = ssub.s32 %s13, 1
      %s296 = smul.u32 4, %s24
      %p297 = scmp.lt.s32.totalorder %s23, 1
      %s298 = scalar_select %p297, %s23, 1
      %p299 = scmp.lt.s32.totalorder %s296, 7
      %s300 = scalar_select %p299, %s296, 7
      %s301 = smul.addr %s298, 8
      %s302 = sadd.s32 %s300, %s301
      %s303 = smul.addr %s302, 4
      %s304 = scalar_lea.vmem %s0, %s303
      %p305 = pneg %p60
      %p306 = pneg %p57
      %p307 = scmp.eq.s32.totalorder %s24, 0
      %s308 = scalar_select %p307, %s25, 0
      %s309 = smul.u32 4, %s308
      %p310 = scmp.lt.s32.totalorder %s23, 1
      %s311 = scalar_select %p310, %s23, 1
      %p312 = scmp.lt.s32.totalorder %s309, 7
      %s313 = scalar_select %p312, %s309, 7
      %s314 = smul.addr %s311, 8
      %s315 = sadd.s32 %s313, %s314
      %s316 = smul.addr %s315, 4
      %s317 = scalar_lea.vmem %s1, %s316
      %p318 = pneg %p92
      %p319 = pneg %p89
      %p320 = pneg %p113
      %p321 = pneg %p110
      %p322 = pneg %p134
      %p323 = pneg %p131
      %p324 = pneg %p155
      %p325 = pneg %p152
      %p326 = pneg %p176
      %p327 = pneg %p173
      %p328 = pneg %p197
      %p329 = pneg %p194
      %p330 = pneg %p225
      %p331 = pneg %p222
      %s332 = smul.u32 4, %s24
      %p333 = scmp.lt.s32.totalorder %s23, 1
      %s334 = scalar_select %p333, %s23, 1
      %p335 = scmp.lt.s32.totalorder %s332, 7
      %s336 = scalar_select %p335, %s332, 7
      %s337 = smul.addr %s334, 8
      %s338 = sadd.s32 %s336, %s337
      %s339 = smul.addr %s338, 8
      %s340 = scalar_lea.vmem %s7, %s339
      %s341 = smul.u32 4, %s24
      %p342 = scmp.lt.s32.totalorder %s23, 1
      %s343 = scalar_select %p342, %s23, 1
      %p344 = scmp.lt.s32.totalorder %s341, 7
      %s345 = scalar_select %p344, %s341, 7
      %s346 = smul.addr %s343, 8
      %s347 = sadd.s32 %s345, %s346
      %s348 = smul.addr %s347, 4
      %s349 = scalar_lea.vmem %s0, %s348
      %s350 = smul.u32 4, %s24
      %p351 = scmp.eq.s32.totalorder %s24, 0
      %s352 = scalar_select %p351, %s25, 0
      %s353 = smul.u32 4, %s352
      %p354 = scmp.lt.s32.totalorder %s23, 1
      %s355 = scalar_select %p354, %s23, 1
      %p356 = scmp.lt.s32.totalorder %s353, 7
      %s357 = scalar_select %p356, %s353, 7
      %s358 = smul.addr %s355, 8
      %s359 = sadd.s32 %s357, %s358
      %s360 = smul.addr %s359, 4
      %s361 = scalar_lea.vmem %s1, %s360
      %p362 = scmp.eq.s32.totalorder %s24, 0
      %s363 = scalar_select %p362, %s25, 0
      %s364 = smul.u32 4, %s363
      %s365 = smul.u32 4, %s24
      %p366 = scmp.lt.s32.totalorder %s23, 1
      %s367 = scalar_select %p366, %s23, 1
      %p368 = scmp.lt.s32.totalorder %s365, 7
      %s369 = scalar_select %p368, %s365, 7
      %s370 = smul.addr %s367, 8
      %s371 = sadd.s32 %s369, %s370
      %s372 = smul.addr %s371, 8
      %s373 = scalar_lea.vmem %s7, %s372
      %s374 = smul.u32 4, %s24
      %p376 = scmp.eq.s32.totalorder %s25, 0
      // Predicated region
      $region49: #{tpu_custom_call.1} parent=47 // pred_check
        %p377 = pneg %p376
      $region50: #{tpu_custom_call.1} parent=47 // pred_check_branch
        %379 = sbr.rel (%p377) target = $region52
      $region51: #{tpu_custom_call.1} parent=47 // pred_region
        %v380 = vld [vmem:[%s349] sm:$0xf]
        %v381 = vld [vmem:[%s349 + $0x4] sm:$0xf]
        %v382 = vld [vmem:[%s349 + $0x8] sm:$0xf]
        %v383 = vld [vmem:[%s349 + $0xc] sm:$0xf]
        %v384 = vld [vmem:[%s2] sm:$0xf]
        %v385 = vld [vmem:[%s2 + $0x4] sm:$0xf]
        %v386 = vld [vmem:[%s2 + $0x8] sm:$0xf]
        %v387 = vld [vmem:[%s2 + $0xc] sm:$0xf]
        %v392 = vunpack.c.l.b16 %v380
        %v393 = vunpack.c.l.b16 %v381
        %v394 = vunpack.c.l.b16 %v382
        %v395 = vunpack.c.l.b16 %v383
        %v396 = vpack.c.b16 %v393, %v392
        %v397 = vpack.c.b16 %v395, %v394
        %v402 = vunpack.c.l.b16 %v384
        %v403 = vunpack.c.l.b16 %v385
        %v404 = vunpack.c.l.b16 %v386
        %v405 = vunpack.c.l.b16 %v387
        %v406 = vpack.c.b16 %v403, %v402
        %v407 = vpack.c.b16 %v405, %v404
        %vm410 = vcmask 261120
        %v412 = vsel %vm410, %v396, 0
        %v415 = vsel %vm410, %v397, 0
        %417 = vmatprep.subr.bf16.mxu0 0
        %418 = vmatpush1.bf16.msra.mxu0 %v406
        %419 = vmatprep.subr.bf16.mxu0 0
        %420 = vmatpush1.bf16.msra.mxu0 %v407
        %421 = vmatprep.subr.bf16.mxu0 0
        %422 = vmatpush1.bf16.msra.mxu0 0
        %423 = vmatprep.subr.bf16.mxu0 0
        %424 = vmatpush1.bf16.msra.mxu0 0
        %425 = vmatprep.subr.bf16.mxu0 0
        %426 = vmatpush1.bf16.msra.mxu0 0
        %427 = vmatprep.subr.bf16.mxu0 0
        %428 = vmatpush1.bf16.msra.mxu0 0
        %429 = vmatprep.subr.bf16.mxu0 0
        %430 = vmatpush1.bf16.msra.mxu0 0
        %431 = vmatprep.subr.bf16.mxu0 0
        %432 = vmatpush1.bf16.msra.mxu0 0
        %433 = vmatprep.subr.bf16.mxu0 0
        %434 = vmatpush1.bf16.msra.mxu0 0
        %435 = vmatprep.subr.bf16.mxu0 0
        %436 = vmatpush1.bf16.msra.mxu0 0
        %437 = vmatprep.subr.bf16.mxu0 0
        %438 = vmatpush1.bf16.msra.mxu0 0
        %439 = vmatprep.subr.bf16.mxu0 0
        %440 = vmatpush1.bf16.msra.mxu0 0
        %441 = vmatprep.subr.bf16.mxu0 0
        %442 = vmatpush1.bf16.msra.mxu0 0
        %443 = vmatprep.subr.bf16.mxu0 0
        %444 = vmatpush1.bf16.msra.mxu0 0
        %445 = vmatprep.subr.bf16.mxu0 0
        %446 = vmatpush1.bf16.msra.mxu0 0
        %447 = vmatprep.subr.bf16.mxu0 0
        %448 = vmatpush1.bf16.msra.mxu0 0
        %449 = vmatprep.mubr.bf16.mxu0 0
        %450 = vmatmul.mubr.bf16.gmra.mrb[0].mxu0 %v412
        %v451 = vpop.f32.mrb[0].mxu0
        %v452 = vadd.f32 0.0, %v451
        %v453 = vpop.f32.mrb[0].mxu0
        %v454 = vpop.f32.mrb[0].mxu0
        %v455 = vadd.f32 0.0, %v454
        %v456 = vpop.f32.mrb[0].mxu0
        %457 = vmatprep.mubr.bf16.mxu0 0
        %458 = vmatmul.mubr.bf16.gmra.mrb[0].mxu0 %v415
        %v459 = vpop.f32.mrb[0].mxu0
        %v460 = vadd.f32 0.0, %v459
        %v461 = vpop.f32.mrb[0].mxu0
        %v462 = vpop.f32.mrb[0].mxu0
        %v463 = vadd.f32 0.0, %v462
        %v464 = vpop.f32.mrb[0].mxu0
        %465 = vdwg.mxu0
        %v466 = vmul.f32 %v452, 0.35355338
        %v467 = vmul.f32 %v455, 0.35355338
        %v468 = vmul.f32 %v460, 0.35355338
        %v469 = vmul.f32 %v463, 0.35355338
        %v470 = vpack.c.bf16 %v467, %v466
        %v471 = vpack.c.bf16 %v469, %v468
        %472 = vst.msk [vmem:[#allocation2] sm:$0xff] %vm410, %v470
        %473 = vst.msk [vmem:[#allocation2 + $0x8] sm:$0xff] %vm410, %v471
        %vm474 = vcmask 31744
        %475 = vst.msk [vmem:[#allocation3] sm:$0xff] %vm474, -inf
        %476 = vst.msk [vmem:[#allocation3 + $0x8] sm:$0xff] %vm474, -inf
        %477 = vst.msk [vmem:[#allocation3 + $0x10] sm:$0xff] %vm474, -inf
        %478 = vst.msk [vmem:[#allocation3 + $0x18] sm:$0xff] %vm474, -inf
        %479 = vst.msk [vmem:[#allocation4] sm:$0xff] %vm474, 0.0
        %480 = vst.msk [vmem:[#allocation4 + $0x8] sm:$0xff] %vm474, 0.0
        %481 = vst.msk [vmem:[#allocation4 + $0x10] sm:$0xff] %vm474, 0.0
        %482 = vst.msk [vmem:[#allocation4 + $0x18] sm:$0xff] %vm474, 0.0
        %483 = vst.msk [vmem:[#allocation5] sm:$0xff] %vm410, 0.0
        %484 = vst.msk [vmem:[#allocation5 + $0x8] sm:$0xff] %vm410, 0.0
        %485 = vst.msk [vmem:[#allocation5 + $0x10] sm:$0xff] %vm410, 0.0
        %486 = vst.msk [vmem:[#allocation5 + $0x18] sm:$0xff] %vm410, 0.0
      $region52: #{tpu_custom_call.1} parent=47 // pred_fallthru
        _
      %p487 = scmp.eq.s32.totalorder %s24, 0
      // Predicated region
      $region53: #{tpu_custom_call.1} parent=47 // pred_check
        %p488 = pneg %p487
      $region54: #{tpu_custom_call.1} parent=47 // pred_check_branch
        %490 = sbr.rel (%p488) target = $region56
      $region55: #{tpu_custom_call.1} parent=47 // pred_region
        %v491 = vld [vmem:[%s361] sm:$0xf]
        %v492 = vld [vmem:[%s361 + $0x4] sm:$0xf]
        %v493 = vld [vmem:[%s361 + $0x8] sm:$0xf]
        %v494 = vld [vmem:[%s361 + $0xc] sm:$0xf]
        %v495 = vld [vmem:[%s3] sm:$0xf]
        %v496 = vld [vmem:[%s3 + $0x4] sm:$0xf]
        %v497 = vld [vmem:[%s3 + $0x8] sm:$0xf]
        %v498 = vld [vmem:[%s3 + $0xc] sm:$0xf]
        %v503 = vunpack.c.l.b16 %v491
        %v504 = vunpack.c.l.b16 %v492
        %v505 = vunpack.c.l.b16 %v493
        %v506 = vunpack.c.l.b16 %v494
        %v507 = vpack.c.b16 %v504, %v503
        %v508 = vpack.c.b16 %v506, %v505
        %v513 = vunpack.c.l.b16 %v495
        %v514 = vunpack.c.l.b16 %v496
        %v515 = vunpack.c.l.b16 %v497
        %v516 = vunpack.c.l.b16 %v498
        %v517 = vpack.c.b16 %v514, %v513
        %v518 = vpack.c.b16 %v516, %v515
        %vm521 = vcmask 261120
        %v523 = vsel %vm521, %v507, 0
        %v526 = vsel %vm521, %v508, 0
        %528 = vmatprep.subr.bf16.mxu0 0
        %529 = vmatpush1.bf16.msra.mxu0 %v517
        %530 = vmatprep.subr.bf16.mxu0 0
        %531 = vmatpush1.bf16.msra.mxu0 %v518
        %532 = vmatprep.subr.bf16.mxu0 0
        %533 = vmatpush1.bf16.msra.mxu0 0
        %534 = vmatprep.subr.bf16.mxu0 0
        %535 = vmatpush1.bf16.msra.mxu0 0
        %536 = vmatprep.subr.bf16.mxu0 0
        %537 = vmatpush1.bf16.msra.mxu0 0
        %538 = vmatprep.subr.bf16.mxu0 0
        %539 = vmatpush1.bf16.msra.mxu0 0
        %540 = vmatprep.subr.bf16.mxu0 0
        %541 = vmatpush1.bf16.msra.mxu0 0
        %542 = vmatprep.subr.bf16.mxu0 0
        %543 = vmatpush1.bf16.msra.mxu0 0
        %544 = vmatprep.subr.bf16.mxu0 0
        %545 = vmatpush1.bf16.msra.mxu0 0
        %546 = vmatprep.subr.bf16.mxu0 0
        %547 = vmatpush1.bf16.msra.mxu0 0
        %548 = vmatprep.subr.bf16.mxu0 0
        %549 = vmatpush1.bf16.msra.mxu0 0
        %550 = vmatprep.subr.bf16.mxu0 0
        %551 = vmatpush1.bf16.msra.mxu0 0
        %552 = vmatprep.subr.bf16.mxu0 0
        %553 = vmatpush1.bf16.msra.mxu0 0
        %554 = vmatprep.subr.bf16.mxu0 0
        %555 = vmatpush1.bf16.msra.mxu0 0
        %556 = vmatprep.subr.bf16.mxu0 0
        %557 = vmatpush1.bf16.msra.mxu0 0
        %558 = vmatprep.subr.bf16.mxu0 0
        %559 = vmatpush1.bf16.msra.mxu0 0
        %560 = vmatprep.mubr.bf16.mxu0 0
        %561 = vmatmul.mubr.bf16.gmra.mrb[0].mxu0 %v523
        %v562 = vpop.f32.mrb[0].mxu0
        %v563 = vadd.f32 0.0, %v562
        %v564 = vpop.f32.mrb[0].mxu0
        %v565 = vpop.f32.mrb[0].mxu0
        %v566 = vadd.f32 0.0, %v565
        %v567 = vpop.f32.mrb[0].mxu0
        %568 = vmatprep.mubr.bf16.mxu0 0
        %569 = vmatmul.mubr.bf16.gmra.mrb[0].mxu0 %v526
        %v570 = vpop.f32.mrb[0].mxu0
        %v571 = vadd.f32 0.0, %v570
        %v572 = vpop.f32.mrb[0].mxu0
        %v573 = vpop.f32.mrb[0].mxu0
        %v574 = vadd.f32 0.0, %v573
        %v575 = vpop.f32.mrb[0].mxu0
        %576 = vdwg.mxu0
        %v577 = vld [vmem:[%s4] sm:$0xf]
        %v578 = vld [vmem:[%s4 + $0x4] sm:$0xf]
        %v579 = vld [vmem:[%s4 + $0x8] sm:$0xf]
        %v580 = vld [vmem:[%s4 + $0xc] sm:$0xf]
        %v585 = vunpack.c.l.b16 %v577
        %v586 = vunpack.c.l.b16 %v578
        %v587 = vunpack.c.l.b16 %v579
        %v588 = vunpack.c.l.b16 %v580
        %v589 = vpack.c.b16 %v586, %v585
        %v590 = vpack.c.b16 %v588, %v587
        %593 = vmatprep.subr.bf16.mxu0 0
        %594 = vmatpush1.bf16.msra.mxu0 %v589
        %595 = vmatprep.subr.bf16.mxu0 0
        %596 = vmatpush1.bf16.msra.mxu0 %v590
        %597 = vmatprep.subr.bf16.mxu0 0
        %598 = vmatpush1.bf16.msra.mxu0 0
        %599 = vmatprep.subr.bf16.mxu0 0
        %600 = vmatpush1.bf16.msra.mxu0 0
        %601 = vmatprep.subr.bf16.mxu0 0
        %602 = vmatpush1.bf16.msra.mxu0 0
        %603 = vmatprep.subr.bf16.mxu0 0
        %604 = vmatpush1.bf16.msra.mxu0 0
        %605 = vmatprep.subr.bf16.mxu0 0
        %606 = vmatpush1.bf16.msra.mxu0 0
        %607 = vmatprep.subr.bf16.mxu0 0
        %608 = vmatpush1.bf16.msra.mxu0 0
        %609 = vmatprep.subr.bf16.mxu0 0
        %610 = vmatpush1.bf16.msra.mxu0 0
        %611 = vmatprep.subr.bf16.mxu0 0
        %612 = vmatpush1.bf16.msra.mxu0 0
        %613 = vmatprep.subr.bf16.mxu0 0
        %614 = vmatpush1.bf16.msra.mxu0 0
        %615 = vmatprep.subr.bf16.mxu0 0
        %616 = vmatpush1.bf16.msra.mxu0 0
        %617 = vmatprep.subr.bf16.mxu0 0
        %618 = vmatpush1.bf16.msra.mxu0 0
        %619 = vmatprep.subr.bf16.mxu0 0
        %620 = vmatpush1.bf16.msra.mxu0 0
        %621 = vmatprep.subr.bf16.mxu0 0
        %622 = vmatpush1.bf16.msra.mxu0 0
        %623 = vmatprep.subr.bf16.mxu0 0
        %624 = vmatpush1.bf16.msra.mxu0 0
        %625 = vmatprep.mubr.bf16.mxu0 0
        %626 = vmatmul.mubr.bf16.gmra.mrb[0].mxu0 %v523
        %v627 = vpop.f32.mrb[0].mxu0
        %v628 = vadd.f32 0.0, %v627
        %v629 = vpop.f32.mrb[0].mxu0
        %v630 = vpop.f32.mrb[0].mxu0
        %v631 = vadd.f32 0.0, %v630
        %v632 = vpop.f32.mrb[0].mxu0
        %633 = vmatprep.mubr.bf16.mxu0 0
        %634 = vmatmul.mubr.bf16.gmra.mrb[0].mxu0 %v526
        %v635 = vpop.f32.mrb[0].mxu0
        %v636 = vadd.f32 0.0, %v635
        %v637 = vpop.f32.mrb[0].mxu0
        %v638 = vpop.f32.mrb[0].mxu0
        %v639 = vadd.f32 0.0, %v638
        %v640 = vpop.f32.mrb[0].mxu0
        %641 = vdwg.mxu0
        %v642 = vpack.c.bf16 %v566, %v563
        %v643 = vpack.c.bf16 %v574, %v571
        %s644 = smul.u32 %s25, 2
        %s645 = smul.addr %s644, 8
        %s646 = scalar_lea.vmem [#allocation6], %s645
        %647 = vst.msk [vmem:[%s646] sm:$0xff] %vm521, %v642
        %648 = vst.msk [vmem:[%s646 + $0x8] sm:$0xff] %vm521, %v643
        %v649 = vpack.c.bf16 %v631, %v628
        %v650 = vpack.c.bf16 %v639, %v636
        %s651 = smul.addr %s644, 8
        %s652 = scalar_lea.vmem [#allocation7], %s651
        %653 = vst.msk [vmem:[%s652] sm:$0xff] %vm521, %v649
        %654 = vst.msk [vmem:[%s652 + $0x8] sm:$0xff] %vm521, %v650
      $region56: #{tpu_custom_call.1} parent=47 // pred_fallthru
        _
      %s655 = smul.u32 %s25, 2
      %s656 = smul.addr %s655, 8
      %s657 = scalar_lea.vmem [#allocation6], %s656
      %v658 = vld [vmem:[%s657] sm:$0xff]
      %v659 = vld [vmem:[%s657 + $0x8] sm:$0xff]
      %s660 = smul.addr %s655, 8
      %s661 = scalar_lea.vmem [#allocation7], %s660
      %v662 = vld [vmem:[%s661] sm:$0xff]
      %v663 = vld [vmem:[%s661 + $0x8] sm:$0xff]
      %v664 = vld [vmem:[#allocation2] sm:$0xff]
      %v665 = vld [vmem:[#allocation2 + $0x8] sm:$0xff]
      %vm666 = vcmask 64512
      %v668 = vsel %vm666, %v664, 0
      %v671 = vsel %vm666, %v665, 0
      %v674 = vsel %vm666, %v658, 0
      %v677 = vsel %vm666, %v659, 0
      %679 = vmatprep.subr.bf16.mxu0 0
      %680 = vmatpush1.bf16.xpose.msra.mxu0 %v674
      %681 = vmatprep.subr.bf16.mxu0 0
      %682 = vmatpush1.bf16.xpose.msra.mxu0 %v677
      %683 = vmatprep.subr.bf16.mxu0 0
      %684 = vmatpush1.bf16.xpose.msra.mxu0 0
      %685 = vmatprep.subr.bf16.mxu0 0
      %686 = vmatpush1.bf16.xpose.msra.mxu0 0
      %687 = vmatprep.subr.bf16.mxu0 0
      %688 = vmatpush1.bf16.xpose.msra.mxu0 0
      %689 = vmatprep.subr.bf16.mxu0 0
      %690 = vmatpush1.bf16.xpose.msra.mxu0 0
      %691 = vmatprep.subr.bf16.mxu0 0
      %692 = vmatpush1.bf16.xpose.msra.mxu0 0
      %693 = vmatprep.subr.bf16.mxu0 0
      %694 = vmatpush1.bf16.xpose.msra.mxu0 0
      %695 = vmatprep.subr.bf16.mxu0 0
      %696 = vmatpush1.bf16.xpose.msra.mxu0 0
      %697 = vmatprep.subr.bf16.mxu0 0
      %698 = vmatpush1.bf16.xpose.msra.mxu0 0
      %699 = vmatprep.subr.bf16.mxu0 0
      %700 = vmatpush1.bf16.xpose.msra.mxu0 0
      %701 = vmatprep.subr.bf16.mxu0 0
      %702 = vmatpush1.bf16.xpose.msra.mxu0 0
      %703 = vmatprep.subr.bf16.mxu0 0
      %704 = vmatpush1.bf16.xpose.msra.mxu0 0
      %705 = vmatprep.subr.bf16.mxu0 0
      %706 = vmatpush1.bf16.xpose.msra.mxu0 0
      %707 = vmatprep.subr.bf16.mxu0 0
      %708 = vmatpush1.bf16.xpose.msra.mxu0 0
      %709 = vmatprep.subr.bf16.mxu0 0
      %710 = vmatpush1.bf16.xpose.msra.mxu0 0
      %711 = vmatprep.mubr.bf16.mxu0 0
      %712 = vmatmul.mubr.bf16.gmra.mrb[0].mxu0 %v668
      %v713 = vpop.f32.mrb[0].mxu0
      %v714 = vadd.f32 0.0, %v713
      %v715 = vpop.f32.mrb[0].mxu0
      %v716 = vpop.f32.mrb[0].mxu0
      %v717 = vadd.f32 0.0, %v716
      %v718 = vpop.f32.mrb[0].mxu0
      %719 = vmatprep.mubr.bf16.mxu0 0
      %720 = vmatmul.mubr.bf16.gmra.mrb[0].mxu0 %v671
      %v721 = vpop.f32.mrb[0].mxu0
      %v722 = vadd.f32 0.0, %v721
      %v723 = vpop.f32.mrb[0].mxu0
      %v724 = vpop.f32.mrb[0].mxu0
      %v725 = vadd.f32 0.0, %v724
      %v726 = vpop.f32.mrb[0].mxu0
      %727 = vdwg.mxu0
      %v728 = vld [vmem:[#allocation3] sm:$0xff]
      %v729 = vld [vmem:[#allocation3 + $0x8] sm:$0xff]
      %v730 = vld [vmem:[#allocation3 + $0x10] sm:$0xff]
      %v731 = vld [vmem:[#allocation3 + $0x18] sm:$0xff]
      %vm732 = vcmask 261120
      %v733 = vsel %vm732, %v714, -inf
      %734 = vmax.xlane.f32.xlu0 %v733
      %v735 = vpop.xlane.xlu0 %734
      %v736 = vsel %vm732, %v717, -inf
      %737 = vmax.xlane.f32.xlu0 %v736
      %v738 = vpop.xlane.xlu0 %737
      %v739 = vsel %vm732, %v722, -inf
      %740 = vmax.xlane.f32.xlu0 %v739
      %v741 = vpop.xlane.xlu0 %740
      %v742 = vsel %vm732, %v725, -inf
      %743 = vmax.xlane.f32.xlu0 %v742
      %v744 = vpop.xlane.xlu0 %743
      %v745 = vmax.f32 %v728, %v735
      %v746 = vmax.f32 %v729, %v738
      %v747 = vmax.f32 %v730, %v741
      %v748 = vmax.f32 %v731, %v744
      %v749 = vsub.f32 %v728, %v745
      %v750 = vsub.f32 %v729, %v746
      %v751 = vsub.f32 %v730, %v747
      %v752 = vsub.f32 %v731, %v748
      %v753 = vmul.f32 %v749, 1.442695
      %v754 = vpow.pop %v753
      %v755 = vmul.f32 %v750, 1.442695
      %v756 = vpow.pop %v755
      %v757 = vmul.f32 %v751, 1.442695
      %v758 = vpow.pop %v757
      %v759 = vmul.f32 %v752, 1.442695
      %v760 = vpow.pop %v759
      %762 = vset.pattern.permute.xlu0 0
      %763 = vperm.xlu0 %762, %v745
      %v764 = vpop.permute.xlu0 %763
      %767 = vset.pattern.permute.xlu0 0
      %768 = vperm.xlu0 %767, %v746
      %v769 = vpop.permute.xlu0 %768
      %772 = vset.pattern.permute.xlu0 0
      %773 = vperm.xlu0 %772, %v747
      %v774 = vpop.permute.xlu0 %773
      %777 = vset.pattern.permute.xlu0 0
      %778 = vperm.xlu0 %777, %v748
      %v779 = vpop.permute.xlu0 %778
      %v781 = vsub.f32 %v714, %v764
      %v782 = vsub.f32 %v717, %v769
      %v783 = vsub.f32 %v722, %v774
      %v784 = vsub.f32 %v725, %v779
      %v785 = vmul.f32 %v781, 1.442695
      %v786 = vpow.pop %v785
      %v787 = vmul.f32 %v782, 1.442695
      %v788 = vpow.pop %v787
      %v789 = vmul.f32 %v783, 1.442695
      %v790 = vpow.pop %v789
      %v791 = vmul.f32 %v784, 1.442695
      %v792 = vpow.pop %v791
      %v793 = vld [vmem:[#allocation4] sm:$0xff]
      %v794 = vld [vmem:[#allocation4 + $0x8] sm:$0xff]
      %v795 = vld [vmem:[#allocation4 + $0x10] sm:$0xff]
      %v796 = vld [vmem:[#allocation4 + $0x18] sm:$0xff]
      %v797 = vmul.f32 %v754, %v793
      %v798 = vmul.f32 %v756, %v794
      %v799 = vmul.f32 %v758, %v795
      %v800 = vmul.f32 %v760, %v796
      %v801 = vsel %vm732, %v786, 0.0
      %802 = vadd.xlane.f32.xlu0 %v801
      %v803 = vpop.xlane.xlu0 %802
      %v804 = vsel %vm732, %v788, 0.0
      %805 = vadd.xlane.f32.xlu0 %v804
      %v806 = vpop.xlane.xlu0 %805
      %v807 = vsel %vm732, %v790, 0.0
      %808 = vadd.xlane.f32.xlu0 %v807
      %v809 = vpop.xlane.xlu0 %808
      %v810 = vsel %vm732, %v792, 0.0
      %811 = vadd.xlane.f32.xlu0 %v810
      %v812 = vpop.xlane.xlu0 %811
      %v813 = vadd.f32 %v797, %v803
      %v814 = vadd.f32 %v798, %v806
      %v815 = vadd.f32 %v799, %v809
      %v816 = vadd.f32 %v800, %v812
      %vm817 = vcmask 7168
      %818 = vst.msk [vmem:[#allocation4] sm:$0xff] %vm817, %v813
      %819 = vst.msk [vmem:[#allocation4 + $0x8] sm:$0xff] %vm817, %v814
      %820 = vst.msk [vmem:[#allocation4 + $0x10] sm:$0xff] %vm817, %v815
      %821 = vst.msk [vmem:[#allocation4 + $0x18] sm:$0xff] %vm817, %v816
      %v822 = vld [vmem:[#allocation5] sm:$0xff]
      %v823 = vld [vmem:[#allocation5 + $0x8] sm:$0xff]
      %v824 = vld [vmem:[#allocation5 + $0x10] sm:$0xff]
      %v825 = vld [vmem:[#allocation5 + $0x18] sm:$0xff]
      %827 = vset.pattern.permute.xlu0 0
      %828 = vperm.xlu0 %827, %v754
      %v829 = vpop.permute.xlu0 %828
      %832 = vset.pattern.permute.xlu0 0
      %833 = vperm.xlu0 %832, %v756
      %v834 = vpop.permute.xlu0 %833
      %837 = vset.pattern.permute.xlu0 0
      %838 = vperm.xlu0 %837, %v758
      %v839 = vpop.permute.xlu0 %838
      %842 = vset.pattern.permute.xlu0 0
      %843 = vperm.xlu0 %842, %v760
      %v844 = vpop.permute.xlu0 %843
      %v846 = vmul.f32 %v829, %v822
      %v847 = vmul.f32 %v834, %v823
      %v848 = vmul.f32 %v839, %v824
      %v849 = vmul.f32 %v844, %v825
      %v850 = vpack.c.bf16 %v788, %v786
      %v851 = vpack.c.bf16 %v792, %v790
      %v853 = vsel %vm732, %v850, 0
      %v856 = vsel %vm732, %v851, 0
      %858 = vmatprep.subr.bf16.mxu0 0
      %859 = vmatpush1.bf16.msra.mxu0 %v662
      %860 = vmatprep.subr.bf16.mxu0 0
      %861 = vmatpush1.bf16.msra.mxu0 %v663
      %862 = vmatprep.subr.bf16.mxu0 0
      %863 = vmatpush1.bf16.msra.mxu0 0
      %864 = vmatprep.subr.bf16.mxu0 0
      %865 = vmatpush1.bf16.msra.mxu0 0
      %866 = vmatprep.subr.bf16.mxu0 0
      %867 = vmatpush1.bf16.msra.mxu0 0
      %868 = vmatprep.subr.bf16.mxu0 0
      %869 = vmatpush1.bf16.msra.mxu0 0
      %870 = vmatprep.subr.bf16.mxu0 0
      %871 = vmatpush1.bf16.msra.mxu0 0
      %872 = vmatprep.subr.bf16.mxu0 0
      %873 = vmatpush1.bf16.msra.mxu0 0
      %874 = vmatprep.subr.bf16.mxu0 0
      %875 = vmatpush1.bf16.msra.mxu0 0
      %876 = vmatprep.subr.bf16.mxu0 0
      %877 = vmatpush1.bf16.msra.mxu0 0
      %878 = vmatprep.subr.bf16.mxu0 0
      %879 = vmatpush1.bf16.msra.mxu0 0
      %880 = vmatprep.subr.bf16.mxu0 0
      %881 = vmatpush1.bf16.msra.mxu0 0
      %882 = vmatprep.subr.bf16.mxu0 0
      %883 = vmatpush1.bf16.msra.mxu0 0
      %884 = vmatprep.subr.bf16.mxu0 0
      %885 = vmatpush1.bf16.msra.mxu0 0
      %886 = vmatprep.subr.bf16.mxu0 0
      %887 = vmatpush1.bf16.msra.mxu0 0
      %888 = vmatprep.subr.bf16.mxu0 0
      %889 = vmatpush1.bf16.msra.mxu0 0
      %890 = vmatprep.mubr.bf16.mxu0 0
      %891 = vmatmul.mubr.bf16.gmra.mrb[0].mxu0 %v853
      %v892 = vpop.f32.mrb[0].mxu0
      %v893 = vadd.f32 0.0, %v892
      %v894 = vpop.f32.mrb[0].mxu0
      %v895 = vpop.f32.mrb[0].mxu0
      %v896 = vadd.f32 0.0, %v895
      %v897 = vpop.f32.mrb[0].mxu0
      %898 = vmatprep.mubr.bf16.mxu0 0
      %899 = vmatmul.mubr.bf16.gmra.mrb[0].mxu0 %v856
      %v900 = vpop.f32.mrb[0].mxu0
      %v901 = vadd.f32 0.0, %v900
      %v902 = vpop.f32.mrb[0].mxu0
      %v903 = vpop.f32.mrb[0].mxu0
      %v904 = vadd.f32 0.0, %v903
      %v905 = vpop.f32.mrb[0].mxu0
      %906 = vdwg.mxu0
      %v907 = vadd.f32 %v846, %v893
      %v908 = vadd.f32 %v847, %v896
      %v909 = vadd.f32 %v848, %v901
      %v910 = vadd.f32 %v849, %v904
      %911 = vst.msk [vmem:[#allocation5] sm:$0xff] %vm666, %v907
      %912 = vst.msk [vmem:[#allocation5 + $0x8] sm:$0xff] %vm666, %v908
      %913 = vst.msk [vmem:[#allocation5 + $0x10] sm:$0xff] %vm666, %v909
      %914 = vst.msk [vmem:[#allocation5 + $0x18] sm:$0xff] %vm666, %v910
      %915 = vst.msk [vmem:[#allocation3] sm:$0xff] %vm817, %v745
      %916 = vst.msk [vmem:[#allocation3 + $0x8] sm:$0xff] %vm817, %v746
      %917 = vst.msk [vmem:[#allocation3 + $0x10] sm:$0xff] %vm817, %v747
      %918 = vst.msk [vmem:[#allocation3 + $0x18] sm:$0xff] %vm817, %v748
      %921 = vrot.lane.b32.xlu0 %v664, 120
      %v922 = vpop.permute.xlu0 %921
      %923 = vrot.lane.b32.xlu0 %v665, 120
      %v924 = vpop.permute.xlu0 %923
      %927 = vrot.lane.b32.xlu0 %v658, 120
      %v928 = vpop.permute.xlu0 %927
      %929 = vrot.lane.b32.xlu0 %v659, 120
      %v930 = vpop.permute.xlu0 %929
      %v932 = vsel %vm666, %v922, 0
      %v935 = vsel %vm666, %v924, 0
      %v938 = vsel %vm666, %v928, 0
      %v941 = vsel %vm666, %v930, 0
      %943 = vmatprep.subr.bf16.mxu0 0
      %944 = vmatpush1.bf16.xpose.msra.mxu0 %v938
      %945 = vmatprep.subr.bf16.mxu0 0
      %946 = vmatpush1.bf16.xpose.msra.mxu0 %v941
      %947 = vmatprep.subr.bf16.mxu0 0
      %948 = vmatpush1.bf16.xpose.msra.mxu0 0
      %949 = vmatprep.subr.bf16.mxu0 0
      %950 = vmatpush1.bf16.xpose.msra.mxu0 0
      %951 = vmatprep.subr.bf16.mxu0 0
      %952 = vmatpush1.bf16.xpose.msra.mxu0 0
      %953 = vmatprep.subr.bf16.mxu0 0
      %954 = vmatpush1.bf16.xpose.msra.mxu0 0
      %955 = vmatprep.subr.bf16.mxu0 0
      %956 = vmatpush1.bf16.xpose.msra.mxu0 0
      %957 = vmatprep.subr.bf16.mxu0 0
      %958 = vmatpush1.bf16.xpose.msra.mxu0 0
      %959 = vmatprep.subr.bf16.mxu0 0
      %960 = vmatpush1.bf16.xpose.msra.mxu0 0
      %961 = vmatprep.subr.bf16.mxu0 0
      %962 = vmatpush1.bf16.xpose.msra.mxu0 0
      %963 = vmatprep.subr.bf16.mxu0 0
      %964 = vmatpush1.bf16.xpose.msra.mxu0 0
      %965 = vmatprep.subr.bf16.mxu0 0
      %966 = vmatpush1.bf16.xpose.msra.mxu0 0
      %967 = vmatprep.subr.bf16.mxu0 0
      %968 = vmatpush1.bf16.xpose.msra.mxu0 0
      %969 = vmatprep.subr.bf16.mxu0 0
      %970 = vmatpush1.bf16.xpose.msra.mxu0 0
      %971 = vmatprep.subr.bf16.mxu0 0
      %972 = vmatpush1.bf16.xpose.msra.mxu0 0
      %973 = vmatprep.subr.bf16.mxu0 0
      %974 = vmatpush1.bf16.xpose.msra.mxu0 0
      %975 = vmatprep.mubr.bf16.mxu0 0
      %976 = vmatmul.mubr.bf16.gmra.mrb[0].mxu0 %v932
      %v977 = vpop.f32.mrb[0].mxu0
      %v978 = vadd.f32 0.0, %v977
      %v979 = vpop.f32.mrb[0].mxu0
      %v980 = vpop.f32.mrb[0].mxu0
      %v981 = vadd.f32 0.0, %v980
      %v982 = vpop.f32.mrb[0].mxu0
      %983 = vmatprep.mubr.bf16.mxu0 0
      %984 = vmatmul.mubr.bf16.gmra.mrb[0].mxu0 %v935
      %v985 = vpop.f32.mrb[0].mxu0
      %v986 = vadd.f32 0.0, %v985
      %v987 = vpop.f32.mrb[0].mxu0
      %v988 = vpop.f32.mrb[0].mxu0
      %v989 = vadd.f32 0.0, %v988
      %v990 = vpop.f32.mrb[0].mxu0
      %991 = vdwg.mxu0
      %v992 = vld [vmem:[#allocation3] sm:$0xff]
      %v993 = vld [vmem:[#allocation3 + $0x8] sm:$0xff]
      %v994 = vld [vmem:[#allocation3 + $0x10] sm:$0xff]
      %v995 = vld [vmem:[#allocation3 + $0x18] sm:$0xff]
      %v996 = vsel %vm732, %v978, -inf
      %997 = vmax.xlane.f32.xlu0 %v996
      %v998 = vpop.xlane.xlu0 %997
      %v999 = vsel %vm732, %v981, -inf
      %1000 = vmax.xlane.f32.xlu0 %v999
      %v1001 = vpop.xlane.xlu0 %1000
      %v1002 = vsel %vm732, %v986, -inf
      %1003 = vmax.xlane.f32.xlu0 %v1002
      %v1004 = vpop.xlane.xlu0 %1003
      %v1005 = vsel %vm732, %v989, -inf
      %1006 = vmax.xlane.f32.xlu0 %v1005
      %v1007 = vpop.xlane.xlu0 %1006
      %v1008 = vmax.f32 %v992, %v998
      %v1009 = vmax.f32 %v993, %v1001
      %v1010 = vmax.f32 %v994, %v1004
      %v1011 = vmax.f32 %v995, %v1007
      %v1012 = vsub.f32 %v992, %v1008
      %v1013 = vsub.f32 %v993, %v1009
      %v1014 = vsub.f32 %v994, %v1010
      %v1015 = vsub.f32 %v995, %v1011
      %v1016 = vmul.f32 %v1012, 1.442695
      %v1017 = vpow.pop %v1016
      %v1018 = vmul.f32 %v1013, 1.442695
      %v1019 = vpow.pop %v1018
      %v1020 = vmul.f32 %v1014, 1.442695
      %v1021 = vpow.pop %v1020
      %v1022 = vmul.f32 %v1015, 1.442695
      %v1023 = vpow.pop %v1022
      %1025 = vset.pattern.permute.xlu0 1
      %1026 = vperm.xlu0 %1025, %v1008
      %v1027 = vpop.permute.xlu0 %1026
      %1030 = vset.pattern.permute.xlu0 1
      %1031 = vperm.xlu0 %1030, %v1009
      %v1032 = vpop.permute.xlu0 %1031
      %1035 = vset.pattern.permute.xlu0 1
      %1036 = vperm.xlu0 %1035, %v1010
      %v1037 = vpop.permute.xlu0 %1036
      %1040 = vset.pattern.permute.xlu0 1
      %1041 = vperm.xlu0 %1040, %v1011
      %v1042 = vpop.permute.xlu0 %1041
      %v1044 = vsub.f32 %v978, %v1027
      %v1045 = vsub.f32 %v981, %v1032
      %v1046 = vsub.f32 %v986, %v1037
      %v1047 = vsub.f32 %v989, %v1042
      %v1048 = vmul.f32 %v1044, 1.442695
      %v1049 = vpow.pop %v1048
      %v1050 = vmul.f32 %v1045, 1.442695
      %v1051 = vpow.pop %v1050
      %v1052 = vmul.f32 %v1046, 1.442695
      %v1053 = vpow.pop %v1052
      %v1054 = vmul.f32 %v1047, 1.442695
      %v1055 = vpow.pop %v1054
      %v1056 = vld [vmem:[#allocation4] sm:$0xff]
      %v1057 = vld [vmem:[#allocation4 + $0x8] sm:$0xff]
      %v1058 = vld [vmem:[#allocation4 + $0x10] sm:$0xff]
      %v1059 = vld [vmem:[#allocation4 + $0x18] sm:$0xff]
      %v1060 = vmul.f32 %v1017, %v1056
      %v1061 = vmul.f32 %v1019, %v1057
      %v1062 = vmul.f32 %v1021, %v1058
      %v1063 = vmul.f32 %v1023, %v1059
      %v1064 = vsel %vm732, %v1049, 0.0
      %1065 = vadd.xlane.f32.xlu0 %v1064
      %v1066 = vpop.xlane.xlu0 %1065
      %v1067 = vsel %vm732, %v1051, 0.0
      %1068 = vadd.xlane.f32.xlu0 %v1067
      %v1069 = vpop.xlane.xlu0 %1068
      %v1070 = vsel %vm732, %v1053, 0.0
      %1071 = vadd.xlane.f32.xlu0 %v1070
      %v1072 = vpop.xlane.xlu0 %1071
      %v1073 = vsel %vm732, %v1055, 0.0
      %1074 = vadd.xlane.f32.xlu0 %v1073
      %v1075 = vpop.xlane.xlu0 %1074
      %v1076 = vadd.f32 %v1060, %v1066
      %v1077 = vadd.f32 %v1061, %v1069
      %v1078 = vadd.f32 %v1062, %v1072
      %v1079 = vadd.f32 %v1063, %v1075
      %vm1080 = vcmask 15368
      %1081 = vst.msk [vmem:[#allocation4] sm:$0xff] %vm1080, %v1076
      %1082 = vst.msk [vmem:[#allocation4 + $0x8] sm:$0xff] %vm1080, %v1077
      %1083 = vst.msk [vmem:[#allocation4 + $0x10] sm:$0xff] %vm1080, %v1078
      %1084 = vst.msk [vmem:[#allocation4 + $0x18] sm:$0xff] %vm1080, %v1079
      %v1085 = vld [vmem:[#allocation5] sm:$0xff]
      %v1086 = vld [vmem:[#allocation5 + $0x8] sm:$0xff]
      %v1087 = vld [vmem:[#allocation5 + $0x10] sm:$0xff]
      %v1088 = vld [vmem:[#allocation5 + $0x18] sm:$0xff]
      %1090 = vset.pattern.permute.xlu0 1
      %1091 = vperm.xlu0 %1090, %v1017
      %v1092 = vpop.permute.xlu0 %1091
      %1095 = vset.pattern.permute.xlu0 1
      %1096 = vperm.xlu0 %1095, %v1019
      %v1097 = vpop.permute.xlu0 %1096
      %1100 = vset.pattern.permute.xlu0 1
      %1101 = vperm.xlu0 %1100, %v1021
      %v1102 = vpop.permute.xlu0 %1101
      %1105 = vset.pattern.permute.xlu0 1
      %1106 = vperm.xlu0 %1105, %v1023
      %v1107 = vpop.permute.xlu0 %1106
      %v1109 = vmul.f32 %v1092, %v1085
      %v1110 = vmul.f32 %v1097, %v1086
      %v1111 = vmul.f32 %v1102, %v1087
      %v1112 = vmul.f32 %v1107, %v1088
      %v1113 = vpack.c.bf16 %v1051, %v1049
      %v1114 = vpack.c.bf16 %v1055, %v1053
      %1117 = vrot.lane.b32.xlu0 %v662, 120
      %v1118 = vpop.permute.xlu0 %1117
      %1119 = vrot.lane.b32.xlu0 %v663, 120
      %v1120 = vpop.permute.xlu0 %1119
      %v1124 = vsel %vm732, %v1113, 0
      %v1127 = vsel %vm732, %v1114, 0
      %1129 = vmatprep.subr.bf16.mxu0 0
      %1130 = vmatpush1.bf16.msra.mxu0 %v1118
      %1131 = vmatprep.subr.bf16.mxu0 0
      %1132 = vmatpush1.bf16.msra.mxu0 %v1120
      %1133 = vmatprep.subr.bf16.mxu0 0
      %1134 = vmatpush1.bf16.msra.mxu0 0
      %1135 = vmatprep.subr.bf16.mxu0 0
      %1136 = vmatpush1.bf16.msra.mxu0 0
      %1137 = vmatprep.subr.bf16.mxu0 0
      %1138 = vmatpush1.bf16.msra.mxu0 0
      %1139 = vmatprep.subr.bf16.mxu0 0
      %1140 = vmatpush1.bf16.msra.mxu0 0
      %1141 = vmatprep.subr.bf16.mxu0 0
      %1142 = vmatpush1.bf16.msra.mxu0 0
      %1143 = vmatprep.subr.bf16.mxu0 0
      %1144 = vmatpush1.bf16.msra.mxu0 0
      %1145 = vmatprep.subr.bf16.mxu0 0
      %1146 = vmatpush1.bf16.msra.mxu0 0
      %1147 = vmatprep.subr.bf16.mxu0 0
      %1148 = vmatpush1.bf16.msra.mxu0 0
      %1149 = vmatprep.subr.bf16.mxu0 0
      %1150 = vmatpush1.bf16.msra.mxu0 0
      %1151 = vmatprep.subr.bf16.mxu0 0
      %1152 = vmatpush1.bf16.msra.mxu0 0
      %1153 = vmatprep.subr.bf16.mxu0 0
      %1154 = vmatpush1.bf16.msra.mxu0 0
      %1155 = vmatprep.subr.bf16.mxu0 0
      %1156 = vmatpush1.bf16.msra.mxu0 0
      %1157 = vmatprep.subr.bf16.mxu0 0
      %1158 = vmatpush1.bf16.msra.mxu0 0
      %1159 = vmatprep.subr.bf16.mxu0 0
      %1160 = vmatpush1.bf16.msra.mxu0 0
      %1161 = vmatprep.mubr.bf16.mxu0 0
      %1162 = vmatmul.mubr.bf16.gmra.mrb[0].mxu0 %v1124
      %v1163 = vpop.f32.mrb[0].mxu0
      %v1164 = vadd.f32 0.0, %v1163
      %v1165 = vpop.f32.mrb[0].mxu0
      %v1166 = vpop.f32.mrb[0].mxu0
      %v1167 = vadd.f32 0.0, %v1166
      %v1168 = vpop.f32.mrb[0].mxu0
      %1169 = vmatprep.mubr.bf16.mxu0 0
      %1170 = vmatmul.mubr.bf16.gmra.mrb[0].mxu0 %v1127
      %v1171 = vpop.f32.mrb[0].mxu0
      %v1172 = vadd.f32 0.0, %v1171
      %v1173 = vpop.f32.mrb[0].mxu0
      %v1174 = vpop.f32.mrb[0].mxu0
      %v1175 = vadd.f32 0.0, %v1174
      %v1176 = vpop.f32.mrb[0].mxu0
      %1177 = vdwg.mxu0
      %1182 = vrot.lane.b32.xlu0 %v1164, 8
      %v1183 = vpop.permute.xlu0 %1182
      %1184 = vrot.lane.b32.xlu0 %v1167, 8
      %v1185 = vpop.permute.xlu0 %1184
      %1186 = vrot.lane.b32.xlu0 %v1172, 8
      %v1187 = vpop.permute.xlu0 %1186
      %1188 = vrot.lane.b32.xlu0 %v1175, 8
      %v1189 = vpop.permute.xlu0 %1188
      %v1194 = vadd.f32 %v1109, %v1183
      %v1195 = vadd.f32 %v1110, %v1185
      %v1196 = vadd.f32 %v1111, %v1187
      %v1197 = vadd.f32 %v1112, %v1189
      %vm1198 = vcmask 130112
      %1199 = vst.msk [vmem:[#allocation5] sm:$0xff] %vm1198, %v1194
      %1200 = vst.msk [vmem:[#allocation5 + $0x8] sm:$0xff] %vm1198, %v1195
      %1201 = vst.msk [vmem:[#allocation5 + $0x10] sm:$0xff] %vm1198, %v1196
      %1202 = vst.msk [vmem:[#allocation5 + $0x18] sm:$0xff] %vm1198, %v1197
      %1203 = vst.msk [vmem:[#allocation3] sm:$0xff] %vm1080, %v1008
      %1204 = vst.msk [vmem:[#allocation3 + $0x8] sm:$0xff] %vm1080, %v1009
      %1205 = vst.msk [vmem:[#allocation3 + $0x10] sm:$0xff] %vm1080, %v1010
      %1206 = vst.msk [vmem:[#allocation3 + $0x18] sm:$0xff] %vm1080, %v1011
      %1207 = vrot.lane.b32.xlu0 %v664, 112
      %v1208 = vpop.permute.xlu0 %1207
      %1209 = vrot.lane.b32.xlu0 %v665, 112
      %v1210 = vpop.permute.xlu0 %1209
      %1211 = vrot.lane.b32.xlu0 %v658, 112
      %v1212 = vpop.permute.xlu0 %1211
      %1213 = vrot.lane.b32.xlu0 %v659, 112
      %v1214 = vpop.permute.xlu0 %1213
      %v1216 = vsel %vm666, %v1208, 0
      %v1219 = vsel %vm666, %v1210, 0
      %v1222 = vsel %vm666, %v1212, 0
      %v1225 = vsel %vm666, %v1214, 0
      %1227 = vmatprep.subr.bf16.mxu0 0
      %1228 = vmatpush1.bf16.xpose.msra.mxu0 %v1222
      %1229 = vmatprep.subr.bf16.mxu0 0
      %1230 = vmatpush1.bf16.xpose.msra.mxu0 %v1225
      %1231 = vmatprep.subr.bf16.mxu0 0
      %1232 = vmatpush1.bf16.xpose.msra.mxu0 0
      %1233 = vmatprep.subr.bf16.mxu0 0
      %1234 = vmatpush1.bf16.xpose.msra.mxu0 0
      %1235 = vmatprep.subr.bf16.mxu0 0
      %1236 = vmatpush1.bf16.xpose.msra.mxu0 0
      %1237 = vmatprep.subr.bf16.mxu0 0
      %1238 = vmatpush1.bf16.xpose.msra.mxu0 0
      %1239 = vmatprep.subr.bf16.mxu0 0
      %1240 = vmatpush1.bf16.xpose.msra.mxu0 0
      %1241 = vmatprep.subr.bf16.mxu0 0
      %1242 = vmatpush1.bf16.xpose.msra.mxu0 0
      %1243 = vmatprep.subr.bf16.mxu0 0
      %1244 = vmatpush1.bf16.xpose.msra.mxu0 0
      %1245 = vmatprep.subr.bf16.mxu0 0
      %1246 = vmatpush1.bf16.xpose.msra.mxu0 0
      %1247 = vmatprep.subr.bf16.mxu0 0
      %1248 = vmatpush1.bf16.xpose.msra.mxu0 0
      %1249 = vmatprep.subr.bf16.mxu0 0
      %1250 = vmatpush1.bf16.xpose.msra.mxu0 0
      %1251 = vmatprep.subr.bf16.mxu0 0
      %1252 = vmatpush1.bf16.xpose.msra.mxu0 0
      %1253 = vmatprep.subr.bf16.mxu0 0
      %1254 = vmatpush1.bf16.xpose.msra.mxu0 0
      %1255 = vmatprep.subr.bf16.mxu0 0
      %1256 = vmatpush1.bf16.xpose.msra.mxu0 0
      %1257 = vmatprep.subr.bf16.mxu0 0
      %1258 = vmatpush1.bf16.xpose.msra.mxu0 0
      %1259 = vmatprep.mubr.bf16.mxu0 0
      %1260 = vmatmul.mubr.bf16.gmra.mrb[0].mxu0 %v1216
      %v1261 = vpop.f32.mrb[0].mxu0
      %v1262 = vadd.f32 0.0, %v1261
      %v1263 = vpop.f32.mrb[0].mxu0
      %v1264 = vpop.f32.mrb[0].mxu0
      %v1265 = vadd.f32 0.0, %v1264
      %v1266 = vpop.f32.mrb[0].mxu0
      %1267 = vmatprep.mubr.bf16.mxu0 0
      %1268 = vmatmul.mubr.bf16.gmra.mrb[0].mxu0 %v1219
      %v1269 = vpop.f32.mrb[0].mxu0
      %v1270 = vadd.f32 0.0, %v1269
      %v1271 = vpop.f32.mrb[0].mxu0
      %v1272 = vpop.f32.mrb[0].mxu0
      %v1273 = vadd.f32 0.0, %v1272
      %v1274 = vpop.f32.mrb[0].mxu0
      %1275 = vdwg.mxu0
      %v1276 = vld [vmem:[#allocation3] sm:$0xff]
      %v1277 = vld [vmem:[#allocation3 + $0x8] sm:$0xff]
      %v1278 = vld [vmem:[#allocation3 + $0x10] sm:$0xff]
      %v1279 = vld [vmem:[#allocation3 + $0x18] sm:$0xff]
      %v1280 = vsel %vm732, %v1262, -inf
      %1281 = vmax.xlane.f32.xlu0 %v1280
      %v1282 = vpop.xlane.xlu0 %1281
      %v1283 = vsel %vm732, %v1265, -inf
      %1284 = vmax.xlane.f32.xlu0 %v1283
      %v1285 = vpop.xlane.xlu0 %1284
      %v1286 = vsel %vm732, %v1270, -inf
      %1287 = vmax.xlane.f32.xlu0 %v1286
      %v1288 = vpop.xlane.xlu0 %1287
      %v1289 = vsel %vm732, %v1273, -inf
      %1290 = vmax.xlane.f32.xlu0 %v1289
      %v1291 = vpop.xlane.xlu0 %1290
      %v1292 = vmax.f32 %v1276, %v1282
      %v1293 = vmax.f32 %v1277, %v1285
      %v1294 = vmax.f32 %v1278, %v1288
      %v1295 = vmax.f32 %v1279, %v1291
      %v1296 = vsub.f32 %v1276, %v1292
      %v1297 = vsub.f32 %v1277, %v1293
      %v1298 = vsub.f32 %v1278, %v1294
      %v1299 = vsub.f32 %v1279, %v1295
      %v1300 = vmul.f32 %v1296, 1.442695
      %v1301 = vpow.pop %v1300
      %v1302 = vmul.f32 %v1297, 1.442695
      %v1303 = vpow.pop %v1302
      %v1304 = vmul.f32 %v1298, 1.442695
      %v1305 = vpow.pop %v1304
      %v1306 = vmul.f32 %v1299, 1.442695
      %v1307 = vpow.pop %v1306
      %1309 = vset.pattern.permute.xlu0 2
      %1310 = vperm.xlu0 %1309, %v1292
      %v1311 = vpop.permute.xlu0 %1310
      %1314 = vset.pattern.permute.xlu0 2
      %1315 = vperm.xlu0 %1314, %v1293
      %v1316 = vpop.permute.xlu0 %1315
      %1319 = vset.pattern.permute.xlu0 2
      %1320 = vperm.xlu0 %1319, %v1294
      %v1321 = vpop.permute.xlu0 %1320
      %1324 = vset.pattern.permute.xlu0 2
      %1325 = vperm.xlu0 %1324, %v1295
      %v1326 = vpop.permute.xlu0 %1325
      %v1328 = vsub.f32 %v1262, %v1311
      %v1329 = vsub.f32 %v1265, %v1316
      %v1330 = vsub.f32 %v1270, %v1321
      %v1331 = vsub.f32 %v1273, %v1326
      %v1332 = vmul.f32 %v1328, 1.442695
      %v1333 = vpow.pop %v1332
      %v1334 = vmul.f32 %v1329, 1.442695
      %v1335 = vpow.pop %v1334
      %v1336 = vmul.f32 %v1330, 1.442695
      %v1337 = vpow.pop %v1336
      %v1338 = vmul.f32 %v1331, 1.442695
      %v1339 = vpow.pop %v1338
      %v1340 = vld [vmem:[#allocation4] sm:$0xff]
      %v1341 = vld [vmem:[#allocation4 + $0x8] sm:$0xff]
      %v1342 = vld [vmem:[#allocation4 + $0x10] sm:$0xff]
      %v1343 = vld [vmem:[#allocation4 + $0x18] sm:$0xff]
      %v1344 = vmul.f32 %v1301, %v1340
      %v1345 = vmul.f32 %v1303, %v1341
      %v1346 = vmul.f32 %v1305, %v1342
      %v1347 = vmul.f32 %v1307, %v1343
      %v1348 = vsel %vm732, %v1333, 0.0
      %1349 = vadd.xlane.f32.xlu0 %v1348
      %v1350 = vpop.xlane.xlu0 %1349
      %v1351 = vsel %vm732, %v1335, 0.0
      %1352 = vadd.xlane.f32.xlu0 %v1351
      %v1353 = vpop.xlane.xlu0 %1352
      %v1354 = vsel %vm732, %v1337, 0.0
      %1355 = vadd.xlane.f32.xlu0 %v1354
      %v1356 = vpop.xlane.xlu0 %1355
      %v1357 = vsel %vm732, %v1339, 0.0
      %1358 = vadd.xlane.f32.xlu0 %v1357
      %v1359 = vpop.xlane.xlu0 %1358
      %v1360 = vadd.f32 %v1344, %v1350
      %v1361 = vadd.f32 %v1345, %v1353
      %v1362 = vadd.f32 %v1346, %v1356
      %v1363 = vadd.f32 %v1347, %v1359
      %vm1364 = vcmask 23568
      %1365 = vst.msk [vmem:[#allocation4] sm:$0xff] %vm1364, %v1360
      %1366 = vst.msk [vmem:[#allocation4 + $0x8] sm:$0xff] %vm1364, %v1361
      %1367 = vst.msk [vmem:[#allocation4 + $0x10] sm:$0xff] %vm1364, %v1362
      %1368 = vst.msk [vmem:[#allocation4 + $0x18] sm:$0xff] %vm1364, %v1363
      %v1369 = vld [vmem:[#allocation5] sm:$0xff]
      %v1370 = vld [vmem:[#allocation5 + $0x8] sm:$0xff]
      %v1371 = vld [vmem:[#allocation5 + $0x10] sm:$0xff]
      %v1372 = vld [vmem:[#allocation5 + $0x18] sm:$0xff]
      %1374 = vset.pattern.permute.xlu0 2
      %1375 = vperm.xlu0 %1374, %v1301
      %v1376 = vpop.permute.xlu0 %1375
      %1379 = vset.pattern.permute.xlu0 2
      %1380 = vperm.xlu0 %1379, %v1303
      %v1381 = vpop.permute.xlu0 %1380
      %1384 = vset.pattern.permute.xlu0 2
      %1385 = vperm.xlu0 %1384, %v1305
      %v1386 = vpop.permute.xlu0 %1385
      %1389 = vset.pattern.permute.xlu0 2
      %1390 = vperm.xlu0 %1389, %v1307
      %v1391 = vpop.permute.xlu0 %1390
      %v1393 = vmul.f32 %v1376, %v1369
      %v1394 = vmul.f32 %v1381, %v1370
      %v1395 = vmul.f32 %v1386, %v1371
      %v1396 = vmul.f32 %v1391, %v1372
      %v1397 = vpack.c.bf16 %v1335, %v1333
      %v1398 = vpack.c.bf16 %v1339, %v1337
      %1399 = vrot.lane.b32.xlu0 %v662, 112
      %v1400 = vpop.permute.xlu0 %1399
      %1401 = vrot.lane.b32.xlu0 %v663, 112
      %v1402 = vpop.permute.xlu0 %1401
      %v1406 = vsel %vm732, %v1397, 0
      %v1409 = vsel %vm732, %v1398, 0
      %1411 = vmatprep.subr.bf16.mxu0 0
      %1412 = vmatpush1.bf16.msra.mxu0 %v1400
      %1413 = vmatprep.subr.bf16.mxu0 0
      %1414 = vmatpush1.bf16.msra.mxu0 %v1402
      %1415 = vmatprep.subr.bf16.mxu0 0
      %1416 = vmatpush1.bf16.msra.mxu0 0
      %1417 = vmatprep.subr.bf16.mxu0 0
      %1418 = vmatpush1.bf16.msra.mxu0 0
      %1419 = vmatprep.subr.bf16.mxu0 0
      %1420 = vmatpush1.bf16.msra.mxu0 0
      %1421 = vmatprep.subr.bf16.mxu0 0
      %1422 = vmatpush1.bf16.msra.mxu0 0
      %1423 = vmatprep.subr.bf16.mxu0 0
      %1424 = vmatpush1.bf16.msra.mxu0 0
      %1425 = vmatprep.subr.bf16.mxu0 0
      %1426 = vmatpush1.bf16.msra.mxu0 0
      %1427 = vmatprep.subr.bf16.mxu0 0
      %1428 = vmatpush1.bf16.msra.mxu0 0
      %1429 = vmatprep.subr.bf16.mxu0 0
      %1430 = vmatpush1.bf16.msra.mxu0 0
      %1431 = vmatprep.subr.bf16.mxu0 0
      %1432 = vmatpush1.bf16.msra.mxu0 0
      %1433 = vmatprep.subr.bf16.mxu0 0
      %1434 = vmatpush1.bf16.msra.mxu0 0
      %1435 = vmatprep.subr.bf16.mxu0 0
      %1436 = vmatpush1.bf16.msra.mxu0 0
      %1437 = vmatprep.subr.bf16.mxu0 0
      %1438 = vmatpush1.bf16.msra.mxu0 0
      %1439 = vmatprep.subr.bf16.mxu0 0
      %1440 = vmatpush1.bf16.msra.mxu0 0
      %1441 = vmatprep.subr.bf16.mxu0 0
      %1442 = vmatpush1.bf16.msra.mxu0 0
      %1443 = vmatprep.mubr.bf16.mxu0 0
      %1444 = vmatmul.mubr.bf16.gmra.mrb[0].mxu0 %v1406
      %v1445 = vpop.f32.mrb[0].mxu0
      %v1446 = vadd.f32 0.0, %v1445
      %v1447 = vpop.f32.mrb[0].mxu0
      %v1448 = vpop.f32.mrb[0].mxu0
      %v1449 = vadd.f32 0.0, %v1448
      %v1450 = vpop.f32.mrb[0].mxu0
      %1451 = vmatprep.mubr.bf16.mxu0 0
      %1452 = vmatmul.mubr.bf16.gmra.mrb[0].mxu0 %v1409
      %v1453 = vpop.f32.mrb[0].mxu0
      %v1454 = vadd.f32 0.0, %v1453
      %v1455 = vpop.f32.mrb[0].mxu0
      %v1456 = vpop.f32.mrb[0].mxu0
      %v1457 = vadd.f32 0.0, %v1456
      %v1458 = vpop.f32.mrb[0].mxu0
      %1459 = vdwg.mxu0
      %1464 = vrot.lane.b32.xlu0 %v1446, 16
      %v1465 = vpop.permute.xlu0 %1464
      %1466 = vrot.lane.b32.xlu0 %v1449, 16
      %v1467 = vpop.permute.xlu0 %1466
      %1468 = vrot.lane.b32.xlu0 %v1454, 16
      %v1469 = vpop.permute.xlu0 %1468
      %1470 = vrot.lane.b32.xlu0 %v1457, 16
      %v1471 = vpop.permute.xlu0 %1470
      %v1476 = vadd.f32 %v1393, %v1465
      %v1477 = vadd.f32 %v1394, %v1467
      %v1478 = vadd.f32 %v1395, %v1469
      %v1479 = vadd.f32 %v1396, %v1471
      %vm1480 = vcmask 195712
      %1481 = vst.msk [vmem:[#allocation5] sm:$0xff] %vm1480, %v1476
      %1482 = vst.msk [vmem:[#allocation5 + $0x8] sm:$0xff] %vm1480, %v1477
      %1483 = vst.msk [vmem:[#allocation5 + $0x10] sm:$0xff] %vm1480, %v1478
      %1484 = vst.msk [vmem:[#allocation5 + $0x18] sm:$0xff] %vm1480, %v1479
      %1485 = vst.msk [vmem:[#allocation3] sm:$0xff] %vm1364, %v1292
      %1486 = vst.msk [vmem:[#allocation3 + $0x8] sm:$0xff] %vm1364, %v1293
      %1487 = vst.msk [vmem:[#allocation3 + $0x10] sm:$0xff] %vm1364, %v1294
      %1488 = vst.msk [vmem:[#allocation3 + $0x18] sm:$0xff] %vm1364, %v1295
      %1489 = vrot.lane.b32.xlu0 %v664, 104
      %v1490 = vpop.permute.xlu0 %1489
      %1491 = vrot.lane.b32.xlu0 %v665, 104
      %v1492 = vpop.permute.xlu0 %1491
      %1493 = vrot.lane.b32.xlu0 %v658, 104
      %v1494 = vpop.permute.xlu0 %1493
      %1495 = vrot.lane.b32.xlu0 %v659, 104
      %v1496 = vpop.permute.xlu0 %1495
      %v1498 = vsel %vm666, %v1490, 0
      %v1501 = vsel %vm666, %v1492, 0
      %v1504 = vsel %vm666, %v1494, 0
      %v1507 = vsel %vm666, %v1496, 0
      %1509 = vmatprep.subr.bf16.mxu0 0
      %1510 = vmatpush1.bf16.xpose.msra.mxu0 %v1504
      %1511 = vmatprep.subr.bf16.mxu0 0
      %1512 = vmatpush1.bf16.xpose.msra.mxu0 %v1507
      %1513 = vmatprep.subr.bf16.mxu0 0
      %1514 = vmatpush1.bf16.xpose.msra.mxu0 0
      %1515 = vmatprep.subr.bf16.mxu0 0
      %1516 = vmatpush1.bf16.xpose.msra.mxu0 0
      %1517 = vmatprep.subr.bf16.mxu0 0
      %1518 = vmatpush1.bf16.xpose.msra.mxu0 0
      %1519 = vmatprep.subr.bf16.mxu0 0
      %1520 = vmatpush1.bf16.xpose.msra.mxu0 0
      %1521 = vmatprep.subr.bf16.mxu0 0
      %1522 = vmatpush1.bf16.xpose.msra.mxu0 0
      %1523 = vmatprep.subr.bf16.mxu0 0
      %1524 = vmatpush1.bf16.xpose.msra.mxu0 0
      %1525 = vmatprep.subr.bf16.mxu0 0
      %1526 = vmatpush1.bf16.xpose.msra.mxu0 0
      %1527 = vmatprep.subr.bf16.mxu0 0
      %1528 = vmatpush1.bf16.xpose.msra.mxu0 0
      %1529 = vmatprep.subr.bf16.mxu0 0
      %1530 = vmatpush1.bf16.xpose.msra.mxu0 0
      %1531 = vmatprep.subr.bf16.mxu0 0
      %1532 = vmatpush1.bf16.xpose.msra.mxu0 0
      %1533 = vmatprep.subr.bf16.mxu0 0
      %1534 = vmatpush1.bf16.xpose.msra.mxu0 0
      %1535 = vmatprep.subr.bf16.mxu0 0
      %1536 = vmatpush1.bf16.xpose.msra.mxu0 0
      %1537 = vmatprep.subr.bf16.mxu0 0
      %1538 = vmatpush1.bf16.xpose.msra.mxu0 0
      %1539 = vmatprep.subr.bf16.mxu0 0
      %1540 = vmatpush1.bf16.xpose.msra.mxu0 0
      %1541 = vmatprep.mubr.bf16.mxu0 0
      %1542 = vmatmul.mubr.bf16.gmra.mrb[0].mxu0 %v1498
      %v1543 = vpop.f32.mrb[0].mxu0
      %v1544 = vadd.f32 0.0, %v1543
      %v1545 = vpop.f32.mrb[0].mxu0
      %v1546 = vpop.f32.mrb[0].mxu0
      %v1547 = vadd.f32 0.0, %v1546
      %v1548 = vpop.f32.mrb[0].mxu0
      %1549 = vmatprep.mubr.bf16.mxu0 0
      %1550 = vmatmul.mubr.bf16.gmra.mrb[0].mxu0 %v1501
      %v1551 = vpop.f32.mrb[0].mxu0
      %v1552 = vadd.f32 0.0, %v1551
      %v1553 = vpop.f32.mrb[0].mxu0
      %v1554 = vpop.f32.mrb[0].mxu0
      %v1555 = vadd.f32 0.0, %v1554
      %v1556 = vpop.f32.mrb[0].mxu0
      %1557 = vdwg.mxu0
      %v1558 = vld [vmem:[#allocation3] sm:$0xff]
      %v1559 = vld [vmem:[#allocation3 + $0x8] sm:$0xff]
      %v1560 = vld [vmem:[#allocation3 + $0x10] sm:$0xff]
      %v1561 = vld [vmem:[#allocation3 + $0x18] sm:$0xff]
      %v1562 = vsel %vm732, %v1544, -inf
      %1563 = vmax.xlane.f32.xlu0 %v1562
      %v1564 = vpop.xlane.xlu0 %1563
      %v1565 = vsel %vm732, %v1547, -inf
      %1566 = vmax.xlane.f32.xlu0 %v1565
      %v1567 = vpop.xlane.xlu0 %1566
      %v1568 = vsel %vm732, %v1552, -inf
      %1569 = vmax.xlane.f32.xlu0 %v1568
      %v1570 = vpop.xlane.xlu0 %1569
      %v1571 = vsel %vm732, %v1555, -inf
      %1572 = vmax.xlane.f32.xlu0 %v1571
      %v1573 = vpop.xlane.xlu0 %1572
      %v1574 = vmax.f32 %v1558, %v1564
      %v1575 = vmax.f32 %v1559, %v1567
      %v1576 = vmax.f32 %v1560, %v1570
      %v1577 = vmax.f32 %v1561, %v1573
      %v1578 = vsub.f32 %v1558, %v1574
      %v1579 = vsub.f32 %v1559, %v1575
      %v1580 = vsub.f32 %v1560, %v1576
      %v1581 = vsub.f32 %v1561, %v1577
      %v1582 = vmul.f32 %v1578, 1.442695
      %v1583 = vpow.pop %v1582
      %v1584 = vmul.f32 %v1579, 1.442695
      %v1585 = vpow.pop %v1584
      %v1586 = vmul.f32 %v1580, 1.442695
      %v1587 = vpow.pop %v1586
      %v1588 = vmul.f32 %v1581, 1.442695
      %v1589 = vpow.pop %v1588
      %1591 = vset.pattern.permute.xlu0 3
      %1592 = vperm.xlu0 %1591, %v1574
      %v1593 = vpop.permute.xlu0 %1592
      %1596 = vset.pattern.permute.xlu0 3
      %1597 = vperm.xlu0 %1596, %v1575
      %v1598 = vpop.permute.xlu0 %1597
      %1601 = vset.pattern.permute.xlu0 3
      %1602 = vperm.xlu0 %1601, %v1576
      %v1603 = vpop.permute.xlu0 %1602
      %1606 = vset.pattern.permute.xlu0 3
      %1607 = vperm.xlu0 %1606, %v1577
      %v1608 = vpop.permute.xlu0 %1607
      %v1610 = vsub.f32 %v1544, %v1593
      %v1611 = vsub.f32 %v1547, %v1598
      %v1612 = vsub.f32 %v1552, %v1603
      %v1613 = vsub.f32 %v1555, %v1608
      %v1614 = vmul.f32 %v1610, 1.442695
      %v1615 = vpow.pop %v1614
      %v1616 = vmul.f32 %v1611, 1.442695
      %v1617 = vpow.pop %v1616
      %v1618 = vmul.f32 %v1612, 1.442695
      %v1619 = vpow.pop %v1618
      %v1620 = vmul.f32 %v1613, 1.442695
      %v1621 = vpow.pop %v1620
      %v1622 = vld [vmem:[#allocation4] sm:$0xff]
      %v1623 = vld [vmem:[#allocation4 + $0x8] sm:$0xff]
      %v1624 = vld [vmem:[#allocation4 + $0x10] sm:$0xff]
      %v1625 = vld [vmem:[#allocation4 + $0x18] sm:$0xff]
      %v1626 = vmul.f32 %v1583, %v1622
      %v1627 = vmul.f32 %v1585, %v1623
      %v1628 = vmul.f32 %v1587, %v1624
      %v1629 = vmul.f32 %v1589, %v1625
      %v1630 = vsel %vm732, %v1615, 0.0
      %1631 = vadd.xlane.f32.xlu0 %v1630
      %v1632 = vpop.xlane.xlu0 %1631
      %v1633 = vsel %vm732, %v1617, 0.0
      %1634 = vadd.xlane.f32.xlu0 %v1633
      %v1635 = vpop.xlane.xlu0 %1634
      %v1636 = vsel %vm732, %v1619, 0.0
      %1637 = vadd.xlane.f32.xlu0 %v1636
      %v1638 = vpop.xlane.xlu0 %1637
      %v1639 = vsel %vm732, %v1621, 0.0
      %1640 = vadd.xlane.f32.xlu0 %v1639
      %v1641 = vpop.xlane.xlu0 %1640
      %v1642 = vadd.f32 %v1626, %v1632
      %v1643 = vadd.f32 %v1627, %v1635
      %v1644 = vadd.f32 %v1628, %v1638
      %v1645 = vadd.f32 %v1629, %v1641
      %vm1646 = vcmask 31768
      %1647 = vst.msk [vmem:[#allocation4] sm:$0xff] %vm1646, %v1642
      %1648 = vst.msk [vmem:[#allocation4 + $0x8] sm:$0xff] %vm1646, %v1643
      %1649 = vst.msk [vmem:[#allocation4 + $0x10] sm:$0xff] %vm1646, %v1644
      %1650 = vst.msk [vmem:[#allocation4 + $0x18] sm:$0xff] %vm1646, %v1645
      %v1651 = vld [vmem:[#allocation5] sm:$0xff]
      %v1652 = vld [vmem:[#allocation5 + $0x8] sm:$0xff]
      %v1653 = vld [vmem:[#allocation5 + $0x10] sm:$0xff]
      %v1654 = vld [vmem:[#allocation5 + $0x18] sm:$0xff]
      %1656 = vset.pattern.permute.xlu0 3
      %1657 = vperm.xlu0 %1656, %v1583
      %v1658 = vpop.permute.xlu0 %1657
      %1661 = vset.pattern.permute.xlu0 3
      %1662 = vperm.xlu0 %1661, %v1585
      %v1663 = vpop.permute.xlu0 %1662
      %1666 = vset.pattern.permute.xlu0 3
      %1667 = vperm.xlu0 %1666, %v1587
      %v1668 = vpop.permute.xlu0 %1667
      %1671 = vset.pattern.permute.xlu0 3
      %1672 = vperm.xlu0 %1671, %v1589
      %v1673 = vpop.permute.xlu0 %1672
      %v1675 = vmul.f32 %v1658, %v1651
      %v1676 = vmul.f32 %v1663, %v1652
      %v1677 = vmul.f32 %v1668, %v1653
      %v1678 = vmul.f32 %v1673, %v1654
      %v1679 = vpack.c.bf16 %v1617, %v1615
      %v1680 = vpack.c.bf16 %v1621, %v1619
      %1681 = vrot.lane.b32.xlu0 %v662, 104
      %v1682 = vpop.permute.xlu0 %1681
      %1683 = vrot.lane.b32.xlu0 %v663, 104
      %v1684 = vpop.permute.xlu0 %1683
      %v1688 = vsel %vm732, %v1679, 0
      %v1691 = vsel %vm732, %v1680, 0
      %1693 = vmatprep.subr.bf16.mxu0 0
      %1694 = vmatpush1.bf16.msra.mxu0 %v1682
      %1695 = vmatprep.subr.bf16.mxu0 0
      %1696 = vmatpush1.bf16.msra.mxu0 %v1684
      %1697 = vmatprep.subr.bf16.mxu0 0
      %1698 = vmatpush1.bf16.msra.mxu0 0
      %1699 = vmatprep.subr.bf16.mxu0 0
      %1700 = vmatpush1.bf16.msra.mxu0 0
      %1701 = vmatprep.subr.bf16.mxu0 0
      %1702 = vmatpush1.bf16.msra.mxu0 0
      %1703 = vmatprep.subr.bf16.mxu0 0
      %1704 = vmatpush1.bf16.msra.mxu0 0
      %1705 = vmatprep.subr.bf16.mxu0 0
      %1706 = vmatpush1.bf16.msra.mxu0 0
      %1707 = vmatprep.subr.bf16.mxu0 0
      %1708 = vmatpush1.bf16.msra.mxu0 0
      %1709 = vmatprep.subr.bf16.mxu0 0
      %1710 = vmatpush1.bf16.msra.mxu0 0
      %1711 = vmatprep.subr.bf16.mxu0 0
      %1712 = vmatpush1.bf16.msra.mxu0 0
      %1713 = vmatprep.subr.bf16.mxu0 0
      %1714 = vmatpush1.bf16.msra.mxu0 0
      %1715 = vmatprep.subr.bf16.mxu0 0
      %1716 = vmatpush1.bf16.msra.mxu0 0
      %1717 = vmatprep.subr.bf16.mxu0 0
      %1718 = vmatpush1.bf16.msra.mxu0 0
      %1719 = vmatprep.subr.bf16.mxu0 0
      %1720 = vmatpush1.bf16.msra.mxu0 0
      %1721 = vmatprep.subr.bf16.mxu0 0
      %1722 = vmatpush1.bf16.msra.mxu0 0
      %1723 = vmatprep.subr.bf16.mxu0 0
      %1724 = vmatpush1.bf16.msra.mxu0 0
      %1725 = vmatprep.mubr.bf16.mxu0 0
      %1726 = vmatmul.mubr.bf16.gmra.mrb[0].mxu0 %v1688
      %v1727 = vpop.f32.mrb[0].mxu0
      %v1728 = vadd.f32 0.0, %v1727
      %v1729 = vpop.f32.mrb[0].mxu0
      %v1730 = vpop.f32.mrb[0].mxu0
      %v1731 = vadd.f32 0.0, %v1730
      %v1732 = vpop.f32.mrb[0].mxu0
      %1733 = vmatprep.mubr.bf16.mxu0 0
      %1734 = vmatmul.mubr.bf16.gmra.mrb[0].mxu0 %v1691
      %v1735 = vpop.f32.mrb[0].mxu0
      %v1736 = vadd.f32 0.0, %v1735
      %v1737 = vpop.f32.mrb[0].mxu0
      %v1738 = vpop.f32.mrb[0].mxu0
      %v1739 = vadd.f32 0.0, %v1738
      %v1740 = vpop.f32.mrb[0].mxu0
      %1741 = vdwg.mxu0
      %1746 = vrot.lane.b32.xlu0 %v1728, 24
      %v1747 = vpop.permute.xlu0 %1746
      %1748 = vrot.lane.b32.xlu0 %v1731, 24
      %v1749 = vpop.permute.xlu0 %1748
      %1750 = vrot.lane.b32.xlu0 %v1736, 24
      %v1751 = vpop.permute.xlu0 %1750
      %1752 = vrot.lane.b32.xlu0 %v1739, 24
      %v1753 = vpop.permute.xlu0 %1752
      %v1758 = vadd.f32 %v1675, %v1747
      %v1759 = vadd.f32 %v1676, %v1749
      %v1760 = vadd.f32 %v1677, %v1751
      %v1761 = vadd.f32 %v1678, %v1753
      %vm1762 = vcmask 261312
      %1763 = vst.msk [vmem:[#allocation5] sm:$0xff] %vm1762, %v1758
      %1764 = vst.msk [vmem:[#allocation5 + $0x8] sm:$0xff] %vm1762, %v1759
      %1765 = vst.msk [vmem:[#allocation5 + $0x10] sm:$0xff] %vm1762, %v1760
      %1766 = vst.msk [vmem:[#allocation5 + $0x18] sm:$0xff] %vm1762, %v1761
      %1767 = vst.msk [vmem:[#allocation3] sm:$0xff] %vm1646, %v1574
      %1768 = vst.msk [vmem:[#allocation3 + $0x8] sm:$0xff] %vm1646, %v1575
      %1769 = vst.msk [vmem:[#allocation3 + $0x10] sm:$0xff] %vm1646, %v1576
      %1770 = vst.msk [vmem:[#allocation3 + $0x18] sm:$0xff] %vm1646, %v1577
      %p1771 = scmp.eq.s32.totalorder %s25, 1
      // Predicated region
      $region57: #{tpu_custom_call.1} parent=47 // pred_check
        %p1772 = pneg %p1771
      $region58: #{tpu_custom_call.1} parent=47 // pred_check_branch
        %1774 = sbr.rel (%p1772) target = $region60
      $region59: #{tpu_custom_call.1} parent=47 // pred_region
        %v1775 = vld [vmem:[#allocation4] sm:$0xff]
        %v1776 = vld [vmem:[#allocation4 + $0x8] sm:$0xff]
        %v1777 = vld [vmem:[#allocation4 + $0x10] sm:$0xff]
        %v1778 = vld [vmem:[#allocation4 + $0x18] sm:$0xff]
        %v1779 = vrcp.pop %v1775
        %v1780 = vrcp.pop %v1776
        %v1781 = vrcp.pop %v1777
        %v1782 = vrcp.pop %v1778
        %v1783 = vld [vmem:[#allocation5] sm:$0xff]
        %v1784 = vld [vmem:[#allocation5 + $0x8] sm:$0xff]
        %v1785 = vld [vmem:[#allocation5 + $0x10] sm:$0xff]
        %v1786 = vld [vmem:[#allocation5 + $0x18] sm:$0xff]
        %1788 = vset.pattern.permute.xlu0 0
        %1789 = vperm.xlu0 %1788, %v1779
        %v1790 = vpop.permute.xlu0 %1789
        %1793 = vset.pattern.permute.xlu0 0
        %1794 = vperm.xlu0 %1793, %v1780
        %v1795 = vpop.permute.xlu0 %1794
        %1798 = vset.pattern.permute.xlu0 0
        %1799 = vperm.xlu0 %1798, %v1781
        %v1800 = vpop.permute.xlu0 %1799
        %1803 = vset.pattern.permute.xlu0 0
        %1804 = vperm.xlu0 %1803, %v1782
        %v1805 = vpop.permute.xlu0 %1804
        %v1807 = vmul.f32 %v1783, %v1790
        %v1808 = vmul.f32 %v1784, %v1795
        %v1809 = vmul.f32 %v1785, %v1800
        %v1810 = vmul.f32 %v1786, %v1805
        %1811 = vst.msk [vmem:[#allocation5] sm:$0xff] %vm666, %v1807
        %1812 = vst.msk [vmem:[#allocation5 + $0x8] sm:$0xff] %vm666, %v1808
        %1813 = vst.msk [vmem:[#allocation5 + $0x10] sm:$0xff] %vm666, %v1809
        %1814 = vst.msk [vmem:[#allocation5 + $0x18] sm:$0xff] %vm666, %v1810
        %v1815 = vld [vmem:[#allocation5] sm:$0xff]
        %v1816 = vld [vmem:[#allocation5 + $0x8] sm:$0xff]
        %v1817 = vld [vmem:[#allocation5 + $0x10] sm:$0xff]
        %v1818 = vld [vmem:[#allocation5 + $0x18] sm:$0xff]
        %1819 = vset.pattern.permute.xlu0 1
        %1820 = vperm.xlu0 %1819, %v1779
        %v1821 = vpop.permute.xlu0 %1820
        %1823 = vset.pattern.permute.xlu0 1
        %1824 = vperm.xlu0 %1823, %v1780
        %v1825 = vpop.permute.xlu0 %1824
        %1827 = vset.pattern.permute.xlu0 1
        %1828 = vperm.xlu0 %1827, %v1781
        %v1829 = vpop.permute.xlu0 %1828
        %1831 = vset.pattern.permute.xlu0 1
        %1832 = vperm.xlu0 %1831, %v1782
        %v1833 = vpop.permute.xlu0 %1832
        %v1835 = vmul.f32 %v1815, %v1821
        %v1836 = vmul.f32 %v1816, %v1825
        %v1837 = vmul.f32 %v1817, %v1829
        %v1838 = vmul.f32 %v1818, %v1833
        %1839 = vst.msk [vmem:[#allocation5] sm:$0xff] %vm1198, %v1835
        %1840 = vst.msk [vmem:[#allocation5 + $0x8] sm:$0xff] %vm1198, %v1836
        %1841 = vst.msk [vmem:[#allocation5 + $0x10] sm:$0xff] %vm1198, %v1837
        %1842 = vst.msk [vmem:[#allocation5 + $0x18] sm:$0xff] %vm1198, %v1838
        %v1843 = vld [vmem:[#allocation5] sm:$0xff]
        %v1844 = vld [vmem:[#allocation5 + $0x8] sm:$0xff]
        %v1845 = vld [vmem:[#allocation5 + $0x10] sm:$0xff]
        %v1846 = vld [vmem:[#allocation5 + $0x18] sm:$0xff]
        %1847 = vset.pattern.permute.xlu0 2
        %1848 = vperm.xlu0 %1847, %v1779
        %v1849 = vpop.permute.xlu0 %1848
        %1851 = vset.pattern.permute.xlu0 2
        %1852 = vperm.xlu0 %1851, %v1780
        %v1853 = vpop.permute.xlu0 %1852
        %1855 = vset.pattern.permute.xlu0 2
        %1856 = vperm.xlu0 %1855, %v1781
        %v1857 = vpop.permute.xlu0 %1856
        %1859 = vset.pattern.permute.xlu0 2
        %1860 = vperm.xlu0 %1859, %v1782
        %v1861 = vpop.permute.xlu0 %1860
        %v1863 = vmul.f32 %v1843, %v1849
        %v1864 = vmul.f32 %v1844, %v1853
        %v1865 = vmul.f32 %v1845, %v1857
        %v1866 = vmul.f32 %v1846, %v1861
        %1867 = vst.msk [vmem:[#allocation5] sm:$0xff] %vm1480, %v1863
        %1868 = vst.msk [vmem:[#allocation5 + $0x8] sm:$0xff] %vm1480, %v1864
        %1869 = vst.msk [vmem:[#allocation5 + $0x10] sm:$0xff] %vm1480, %v1865
        %1870 = vst.msk [vmem:[#allocation5 + $0x18] sm:$0xff] %vm1480, %v1866
        %v1871 = vld [vmem:[#allocation5] sm:$0xff]
        %v1872 = vld [vmem:[#allocation5 + $0x8] sm:$0xff]
        %v1873 = vld [vmem:[#allocation5 + $0x10] sm:$0xff]
        %v1874 = vld [vmem:[#allocation5 + $0x18] sm:$0xff]
        %1875 = vset.pattern.permute.xlu0 3
        %1876 = vperm.xlu0 %1875, %v1779
        %v1877 = vpop.permute.xlu0 %1876
        %1879 = vset.pattern.permute.xlu0 3
        %1880 = vperm.xlu0 %1879, %v1780
        %v1881 = vpop.permute.xlu0 %1880
        %1883 = vset.pattern.permute.xlu0 3
        %1884 = vperm.xlu0 %1883, %v1781
        %v1885 = vpop.permute.xlu0 %1884
        %1887 = vset.pattern.permute.xlu0 3
        %1888 = vperm.xlu0 %1887, %v1782
        %v1889 = vpop.permute.xlu0 %1888
        %v1891 = vmul.f32 %v1871, %v1877
        %v1892 = vmul.f32 %v1872, %v1881
        %v1893 = vmul.f32 %v1873, %v1885
        %v1894 = vmul.f32 %v1874, %v1889
        %1895 = vst.msk [vmem:[#allocation5] sm:$0xff] %vm1762, %v1891
        %1896 = vst.msk [vmem:[#allocation5 + $0x8] sm:$0xff] %vm1762, %v1892
        %1897 = vst.msk [vmem:[#allocation5 + $0x10] sm:$0xff] %vm1762, %v1893
        %1898 = vst.msk [vmem:[#allocation5 + $0x18] sm:$0xff] %vm1762, %v1894
        %v1899 = vld [vmem:[#allocation5] sm:$0xff]
        %v1900 = vld [vmem:[#allocation5 + $0x8] sm:$0xff]
        %v1901 = vld [vmem:[#allocation5 + $0x10] sm:$0xff]
        %v1902 = vld [vmem:[#allocation5 + $0x18] sm:$0xff]
        %v1903 = vpack.c.bf16 %v1900, %v1899
        %v1904 = vpack.c.bf16 %v1902, %v1901
        %v1905 = vld [vmem:[%s5] sm:$0xf]
        %v1906 = vld [vmem:[%s5 + $0x4] sm:$0xf]
        %v1907 = vld [vmem:[%s5 + $0x8] sm:$0xf]
        %v1908 = vld [vmem:[%s5 + $0xc] sm:$0xf]
        %v1909 = vld [vmem:[%s6] sm:$0x1]
        %v1911 = vlaneseq
        %v1912 = vshrl.u32 %v1911, 7
        %v1913 = vsub.s32 0, %v1912
        %v1914 = vrot.slane %v1909, %v1913
        %v1920 = vunpack.c.l.b16 %v1905
        %v1921 = vunpack.c.l.b16 %v1906
        %v1922 = vunpack.c.l.b16 %v1907
        %v1923 = vunpack.c.l.b16 %v1908
        %v1924 = vpack.c.b16 %v1921, %v1920
        %v1925 = vpack.c.b16 %v1923, %v1922
        %v1929 = vsel %vm732, %v1903, 0
        %v1932 = vsel %vm732, %v1904, 0
        %1934 = vmatprep.subr.bf16.mxu0 0
        %1935 = vmatpush1.bf16.msra.mxu0 %v1924
        %1936 = vmatprep.subr.bf16.mxu0 0
        %1937 = vmatpush1.bf16.msra.mxu0 %v1925
        %1938 = vmatprep.subr.bf16.mxu0 0
        %1939 = vmatpush1.bf16.msra.mxu0 0
        %1940 = vmatprep.subr.bf16.mxu0 0
        %1941 = vmatpush1.bf16.msra.mxu0 0
        %1942 = vmatprep.subr.bf16.mxu0 0
        %1943 = vmatpush1.bf16.msra.mxu0 0
        %1944 = vmatprep.subr.bf16.mxu0 0
        %1945 = vmatpush1.bf16.msra.mxu0 0
        %1946 = vmatprep.subr.bf16.mxu0 0
        %1947 = vmatpush1.bf16.msra.mxu0 0
        %1948 = vmatprep.subr.bf16.mxu0 0
        %1949 = vmatpush1.bf16.msra.mxu0 0
        %1950 = vmatprep.subr.bf16.mxu0 0
        %1951 = vmatpush1.bf16.msra.mxu0 0
        %1952 = vmatprep.subr.bf16.mxu0 0
        %1953 = vmatpush1.bf16.msra.mxu0 0
        %1954 = vmatprep.subr.bf16.mxu0 0
        %1955 = vmatpush1.bf16.msra.mxu0 0
        %1956 = vmatprep.subr.bf16.mxu0 0
        %1957 = vmatpush1.bf16.msra.mxu0 0
        %1958 = vmatprep.subr.bf16.mxu0 0
        %1959 = vmatpush1.bf16.msra.mxu0 0
        %1960 = vmatprep.subr.bf16.mxu0 0
        %1961 = vmatpush1.bf16.msra.mxu0 0
        %1962 = vmatprep.subr.bf16.mxu0 0
        %1963 = vmatpush1.bf16.msra.mxu0 0
        %1964 = vmatprep.subr.bf16.mxu0 0
        %1965 = vmatpush1.bf16.msra.mxu0 0
        %1966 = vmatprep.mubr.bf16.mxu0 0
        %1967 = vmatmul.mubr.bf16.gmra.mrb[0].mxu0 %v1929
        %v1968 = vpop.f32.mrb[0].mxu0
        %v1969 = vadd.f32 %v1914, %v1968
        %v1970 = vpop.f32.mrb[0].mxu0
        %v1971 = vpop.f32.mrb[0].mxu0
        %v1972 = vadd.f32 %v1914, %v1971
        %v1973 = vpop.f32.mrb[0].mxu0
        %1974 = vmatprep.mubr.bf16.mxu0 0
        %1975 = vmatmul.mubr.bf16.gmra.mrb[0].mxu0 %v1932
        %v1976 = vpop.f32.mrb[0].mxu0
        %v1977 = vadd.f32 %v1914, %v1976
        %v1978 = vpop.f32.mrb[0].mxu0
        %v1979 = vpop.f32.mrb[0].mxu0
        %v1980 = vadd.f32 %v1914, %v1979
        %v1981 = vpop.f32.mrb[0].mxu0
        %1982 = vdwg.mxu0
        %1983 = vst.msk [vmem:[%s373] sm:$0xff] %vm732, %v1969
        %1984 = vst.msk [vmem:[%s373 + $0x8] sm:$0xff] %vm732, %v1972
        %1985 = vst.msk [vmem:[%s373 + $0x10] sm:$0xff] %vm732, %v1977
        %1986 = vst.msk [vmem:[%s373 + $0x18] sm:$0xff] %vm732, %v1980
      $region60: #{tpu_custom_call.1} parent=47 // pred_fallthru
        _
      %s1987 = smul.u32 4, %s24
      %p1988 = scmp.lt.s32.totalorder %s23, 1
      %s1989 = scalar_select %p1988, %s23, 1
      %p1990 = scmp.lt.s32.totalorder %s1987, 7
      %s1991 = scalar_select %p1990, %s1987, 7
      %s1992 = smul.addr %s1989, 8
      %s1993 = sadd.s32 %s1991, %s1992
      %s1994 = smul.addr %s1993, 8
      %s1995 = scalar_lea.vmem %s7, %s1994
      // Predicated region
      $region61: #{tpu_custom_call.1} parent=47 // pred_check
        %p1996 = pneg %p222
      $region62: #{tpu_custom_call.1} parent=47 // pred_check_branch
        %1998 = sbr.rel (%p1996) target = $region64
      $region63: #{tpu_custom_call.1} parent=47 // pred_region
        %s1999 = smul.u32 4, %s24
      $region64: #{tpu_custom_call.1} parent=47 // pred_fallthru
        _
    $region48: #{tpu_custom_call.1} parent=5 // pred_fallthru
      _
    %p2000 = scmp.le.s32.totalorder 2, %s13
    // Predicated region
    $region65: #{tpu_custom_call.1} parent=5 // pred_check
      %p2001 = pneg %p2000
    $region66: #{tpu_custom_call.1} parent=5 // pred_check_branch
      %2003 = sbr.rel (%p2001) target = $region68
    $region67: #{tpu_custom_call.1} parent=5 // pred_region
      %s2004 = ssub.s32 %s13, 2
      // Predicated region
      $region69: #{tpu_custom_call.1} parent=67 // pred_check
        %p2005 = pneg %p228
      $region70: #{tpu_custom_call.1} parent=67 // pred_check_branch
        %2007 = sbr.rel (%p2005) target = $region72
      $region71: #{tpu_custom_call.1} parent=67 // pred_region
        %s2008 = smul.u32 4, %s27
        %p2009 = scmp.lt.s32.totalorder %s26, 1
        %s2010 = scalar_select %p2009, %s26, 1
        %p2011 = scmp.lt.s32.totalorder %s2008, 7
        %s2012 = scalar_select %p2011, %s2008, 7
        %s2013 = smul.addr %s2010, 8
        %s2014 = sadd.s32 %s2012, %s2013
        %s2015 = smul.addr %s2014, 8
        %s2016 = scalar_lea.vmem %s7, %s2015
      $region72: #{tpu_custom_call.1} parent=67 // pred_fallthru
        _
    $region68: #{tpu_custom_call.1} parent=5 // pred_fallthru
      _
  $region6: #{tpu_custom_call.1} parent=0 // loop_footer
    %s17 = sadd.s32 1, %s13
  $region7: #{tpu_custom_call.1} parent=0 // loop_footer_branch
    %12 = sbr.rel target = $region3
  $region8: #{tpu_custom_call.1} parent=0 // loop_exit
    _

</llo_original>
